<compile_context>
chip_gen: v7x
topology: tpu7x:2x2x1
jax: 0.10.0
libtpu: 0.0.40
codegen_flags: <defaults>
</compile_context>

<pallas_src>
import math
import functools

import jax
import jax.numpy as jnp
from jax import lax
from jax.experimental import pallas as pl
from jax.experimental.pallas import tpu as pltpu


_NEG_INF = -1000000000.0          # matches masked_fill(..., -1e9) in the reference
_GELU_C = math.sqrt(2.0 / math.pi)
_ACT_DTYPE = jnp.bfloat16         # inter-sublayer activation dtype (f32 math in-kernel)


# ---------------------------------------------------------------------------
# Hardware probes (generation, VMEM cap, bf16 EUP, Buffered(1) support)
# ---------------------------------------------------------------------------

@functools.lru_cache(maxsize=None)
def _tpu_generation():
    try:
        kind = jax.devices()[0].device_kind.lower()
    except Exception:
        return 0
    for g in (7, 6, 5, 4, 3, 2):
        if (f"v{g}" in kind) or (f"tpu{g}" in kind):
            return g
    return 0


@functools.lru_cache(maxsize=None)
def _vmem_limit_bytes():
    # v7x: 64 MiB physical per TC -> cap at 48 MiB to leave compiler headroom.
    # v5e/v6e: 128 MiB physical -> 64 MiB is a safe raise over the scoped default.
    gen = _tpu_generation()
    limit = (48 if gen >= 7 else 64) * 1024 * 1024
    try:
        cap = int(pltpu.get_tpu_info().vmem_capacity_bytes)
        limit = min(limit, (cap * 3) // 4)
    except Exception:
        pass
    return limit


def _transcendental_dtype():
    # bf16 EUP on v6e/v7x ~doubles exp/tanh throughput; v5e has no bf16 EUP.
    return jnp.bfloat16 if _tpu_generation() >= 6 else jnp.float32


@functools.lru_cache(maxsize=None)
def _weight_pipeline_mode():
    """Single-buffer grid-invariant weights (halves their VMEM) when supported."""
    if not hasattr(pl, "Buffered"):
        return None
    try:
        mode = pl.Buffered(1)

        def k(w_ref, x_ref, o_ref):
            o_ref[...] = x_ref[...] + w_ref[...]

        probe = pl.pallas_call(
            k,
            out_shape=jax.ShapeDtypeStruct((16, 128), jnp.float32),
            grid=(2,),
            in_specs=[pl.BlockSpec((8, 128), lambda i: (0, 0), pipeline_mode=mode),
                      pl.BlockSpec((8, 128), lambda i: (i, 0))],
            out_specs=pl.BlockSpec((8, 128), lambda i: (i, 0)),
        )
        jax.block_until_ready(probe(jnp.zeros((8, 128), jnp.float32),
                                    jnp.ones((16, 128), jnp.float32)))
        return mode
    except Exception:
        return None


def _compiler_params(n_axes):
    return pltpu.CompilerParams(dimension_semantics=("parallel",) * n_axes,
                                vmem_limit_bytes=_vmem_limit_bytes())


def _param_spec(a):
    zeros = (0,) * a.ndim
    mode = _weight_pipeline_mode()
    if mode is None:
        return pl.BlockSpec(a.shape, lambda *_: zeros)
    return pl.BlockSpec(a.shape, lambda *_: zeros, pipeline_mode=mode)


def _row_tile(rows):
    for t in (512, 256, 128, 64, 32, 16, 8):
        if rows % t == 0:
            return t
    return rows


def _attn_grid(batch, seq):
    # Prefer tq = S (no K/V / full-seq-LN recompute). On a multi-TC chip with
    # B == 1, split the query rows so the second TensorCore is not idle.
    if batch == 1 and _tpu_generation() >= 7 and seq % 16 == 0:
        return 2, seq // 2
    return 1, seq


# ---------------------------------------------------------------------------
# In-kernel helpers
# ---------------------------------------------------------------------------

def _layer_norm(v, a, b, eps):
    """PyTorch-custom LayerNorm: unbiased std, a*(x-mean)/(std+eps)+b (f32 math)."""
    n = v.shape[-1]
    mean = jnp.mean(v, axis=-1, keepdims=True)
    var = jnp.sum((v - mean) ** 2, axis=-1, keepdims=True) * (1.0 / (n - 1))
    inv = pl.reciprocal(jnp.sqrt(var) + eps, approx=True)     # EUP slot, ~free
    return a * (v - mean) * inv + b


def _split_heads(x, heads, dk):
    # (T, H) -> (heads, T, dk)
    # TODO(synk): expressing the head split through reshaped (H, heads, dk)
    # weights would need a dot_general with two RHS non-contracting dims,
    # which Mosaic does not lower; the slice+stack relayout is kept, but it
    # now runs once per (layer, batch) instead of once per query tile.
    return jnp.stack([x[:, h * dk:(h + 1) * dk] for h in range(heads)], axis=0)


# ---------------------------------------------------------------------------
# Kernels
# ---------------------------------------------------------------------------

def attn_sublayer_kernel(x_ref, bias_ref, pre_a_ref, pre_b_ref, ln_a_ref, ln_b_ref,
                         wq_ref, bq_ref, wk_ref, bk_ref, wv_ref, bv_ref,
                         wo_ref, bo_ref, o_ref,
                         *, heads, eps, fuse_pre_ln, tq, exp_dtype):
    """out = x + Attn(LN1(x)); optionally applies the embedding LN first (layer 0)."""
    x = x_ref[0].astype(jnp.float32)              # (S, H) full sequence
    if fuse_pre_ln:                               # embedding LayerNorm fused into layer 0
        x = _layer_norm(x, pre_a_ref[...], pre_b_ref[...], eps)

    S, H = x.shape
    dk = H // heads
    scale = 1.0 / math.sqrt(dk)

    # One full-sequence pre-norm (computed once per layer/batch element).
    xn = _layer_norm(x, ln_a_ref[...], ln_b_ref[...], eps).astype(jnp.bfloat16)

    if tq == S:                                   # common path: whole sequence = query tile
        x_res, xqn = x, xn
    else:                                         # B==1 multi-TC split path
        start = pl.program_id(1) * tq
        x_res = lax.dynamic_slice_in_dim(x, start, tq, axis=0)
        xqn = lax.dynamic_slice_in_dim(xn, start, tq, axis=0)

    # Full-width projections (MXU-efficient H x H contractions), f32 accumulate.
    q = jnp.dot(xqn, wq_ref[...], preferred_element_type=jnp.float32) + bq_ref[...]
    k = jnp.dot(xn, wk_ref[...], preferred_element_type=jnp.float32) + bk_ref[...]
    v = jnp.dot(xn, wv_ref[...], preferred_element_type=jnp.float32) + bv_ref[...]
    q = q * scale                                 # fold 1/sqrt(dk) into q

    qh = _split_heads(q, heads, dk).astype(jnp.bfloat16)    # (h, tq, dk)
    kh = _split_heads(k, heads, dk).astype(jnp.bfloat16)    # (h, S,  dk)
    vh = _split_heads(v, heads, dk).astype(jnp.bfloat16)    # (h, S,  dk)

    # One batched contraction over all heads.
    scores = jnp.einsum('hqd,hkd->hqk', qh, kh,
                        preferred_element_type=jnp.float32)  # (h, tq, S) f32
    scores = scores + bias_ref[0]                 # (1, S) additive key mask, broadcast
    scores = scores - jnp.max(scores, axis=-1, keepdims=True)

    p = jnp.exp(scores.astype(exp_dtype))         # bf16 EUP on v6e/v7x, f32 on v5e
    denom = jnp.sum(p.astype(jnp.float32), axis=-1, keepdims=True)  # (h, tq, 1) f32

    ctx = jnp.einsum('hqk,hkd->hqd', p.astype(jnp.bfloat16), vh,
                     preferred_element_type=jnp.float32)     # (h, tq, dk)
    # Normalize AFTER the PV matmul: S/dk fewer multiplies than scaling p.
    ctx = ctx * pl.reciprocal(denom, approx=True)

    ctx2 = jnp.concatenate([ctx[h] for h in range(heads)], axis=-1)   # (tq, H)
    attn_out = jnp.dot(ctx2.astype(jnp.bfloat16), wo_ref[...],
                       preferred_element_type=jnp.float32) + bo_ref[...]
    o_ref[0] = (x_res + attn_out).astype(o_ref.dtype)        # residual (dropout = id)


def ffn_sublayer_kernel(x_ref, ln_a_ref, ln_b_ref, w1_ref, b1_ref,
                        w2_ref, b2_ref, o_ref, *, eps, tanh_dtype):
    """out = x + W2(GELU(W1(LN2(x)))); position-wise, tiled over flattened rows."""
    x = x_ref[...].astype(jnp.float32)            # (rows_tile, H)
    xn = _layer_norm(x, ln_a_ref[...], ln_b_ref[...], eps).astype(jnp.bfloat16)
    h1 = jnp.dot(xn, w1_ref[...], preferred_element_type=jnp.float32) + b1_ref[...]
    inner = _GELU_C * (h1 + 0.044715 * h1 * h1 * h1)
    t = jnp.tanh(inner.astype(tanh_dtype)).astype(jnp.float32)   # bf16 EUP on v6e/v7x
    g = (0.5 * h1 * (1.0 + t)).astype(jnp.bfloat16)
    h2 = jnp.dot(g, w2_ref[...], preferred_element_type=jnp.float32) + b2_ref[...]
    o_ref[...] = (x + h2).astype(o_ref.dtype)     # residual (dropout = id)


# ---------------------------------------------------------------------------
# Wrappers (pallas_call plumbing)
# ---------------------------------------------------------------------------

def attention_sublayer(x, attn_bias, pre_ln, ln1, p, heads, *, fuse_pre_ln,
                       out_dtype=_ACT_DTYPE, eps=1e-6):
    B, S, H = x.shape
    assert H % heads == 0
    nq, tq = _attn_grid(B, S)

    inputs = [x, attn_bias, pre_ln[0], pre_ln[1], ln1[0], ln1[1],
              p["wq"], p["bq"], p["wk"], p["bk"], p["wv"], p["bv"],
              p["wo"], p["bo"]]
    in_specs = [pl.BlockSpec((1, S, H), lambda b, qi: (b, 0, 0)),   # full sequence, once
                pl.BlockSpec((1, 1, S), lambda b, qi: (b, 0, 0))]   # additive key bias
    in_specs += [_param_spec(a) for a in inputs[2:]]

    return pl.pallas_call(
        functools.partial(attn_sublayer_kernel, heads=heads, eps=eps,
                          fuse_pre_ln=fuse_pre_ln, tq=tq,
                          exp_dtype=_transcendental_dtype()),
        out_shape=jax.ShapeDtypeStruct((B, S, H), out_dtype),
        grid=(B, nq),
        in_specs=in_specs,
        out_specs=pl.BlockSpec((1, tq, H), lambda b, qi: (b, qi, 0)),
        compiler_params=_compiler_params(2),
    )(*inputs)


def ffn_sublayer(x, p, *, out_dtype=_ACT_DTYPE, eps=1e-6):
    B, S, H = x.shape
    rows = B * S
    x2 = x.reshape(rows, H)                       # flatten: larger MXU-filling row tiles
    ts = _row_tile(rows)

    inputs = [x2, p["ln2_a"], p["ln2_b"], p["w1"], p["b1"], p["w2"], p["b2"]]
    in_specs = [pl.BlockSpec((ts, H), lambda r: (r, 0))]
    in_specs += [_param_spec(a) for a in inputs[1:]]

    out = pl.pallas_call(
        functools.partial(ffn_sublayer_kernel, eps=eps,
                          tanh_dtype=_transcendental_dtype()),
        out_shape=jax.ShapeDtypeStruct((rows, H), out_dtype),
        grid=(rows // ts,),
        in_specs=in_specs,
        out_specs=pl.BlockSpec((ts, H), lambda r: (r, 0)),
        compiler_params=_compiler_params(1),
    )(*inputs)
    return out.reshape(B, S, H)


# ---------------------------------------------------------------------------
# Parameters (deterministic, synthetic) + full forward
# ---------------------------------------------------------------------------

def init_params(key, vocab_size, hidden, n_layers, attn_heads):
    del attn_heads  # head count only affects the kernel, not parameter shapes
    d_ff = hidden * 4
    keys = jax.random.split(key, 4 + n_layers)

    def normal(k, shape, dtype=jnp.float32):
        return (0.02 * jax.random.normal(k, shape, dtype=jnp.float32)).astype(dtype)

    params = {
        # Embeddings (padding_idx=0 rows zeroed, as in nn.Embedding(padding_idx=0))
        "token_emb": normal(keys[0], (vocab_size, hidden)).at[0].set(0.0),
        "segment_emb": normal(keys[1], (2, hidden)).at[0].set(0.0),
        "emb_ln_a": jnp.ones((1, hidden), jnp.float32),
        "emb_ln_b": jnp.zeros((1, hidden), jnp.float32),
        # QA head Linear(hidden, 2), stored (hidden, 2); applied in plain XLA
        "qa_w": normal(keys[2], (hidden, 2)),
        "qa_b": jnp.zeros((2,), jnp.float32),
    }

    layers = []
    for li in range(n_layers):
        lk = jax.random.split(keys[4 + li], 6)
        layers.append({
            # matmul weights: pre-transposed (in, out), stored bf16 (MXU operands)
            "wq": normal(lk[0], (hidden, hidden), jnp.bfloat16),
            "bq": jnp.zeros((1, hidden), jnp.float32),
            "wk": normal(lk[1], (hidden, hidden), jnp.bfloat16),
            "bk": jnp.zeros((1, hidden), jnp.float32),
            "wv": normal(lk[2], (hidden, hidden), jnp.bfloat16),
            "bv": jnp.zeros((1, hidden), jnp.float32),
            "wo": normal(lk[3], (hidden, hidden), jnp.bfloat16),
            "bo": jnp.zeros((1, hidden), jnp.float32),
            "ln1_a": jnp.ones((1, hidden), jnp.float32),
            "ln1_b": jnp.zeros((1, hidden), jnp.float32),
            "ln2_a": jnp.ones((1, hidden), jnp.float32),
            "ln2_b": jnp.zeros((1, hidden), jnp.float32),
            "w1": normal(lk[4], (hidden, d_ff), jnp.bfloat16),
            "b1": jnp.zeros((1, d_ff), jnp.float32),
            "w2": normal(lk[5], (d_ff, hidden), jnp.bfloat16),
            "b2": jnp.zeros((1, hidden), jnp.float32),
        })
    params["layers"] = layers
    return params


def positional_encoding(seq_len, d_model):
    position = jnp.arange(seq_len, dtype=jnp.float32)[:, None]
    div_term = jnp.exp(jnp.arange(0, d_model, 2, dtype=jnp.float32)
                       * -(math.log(10000.0) / d_model))
    pe = jnp.zeros((seq_len, d_model), jnp.float32)
    pe = pe.at[:, 0::2].set(jnp.sin(position * div_term))
    pe = pe.at[:, 1::2].set(jnp.cos((position * div_term)[:, : d_model // 2]))
    return pe


def squad_weight_mapper_forward(params, tokens, segment_label, attn_heads):
    B, S = tokens.shape
    H = params["token_emb"].shape[1]

    # Reference mask is (B,1,S,S) with mask[b,:,:,j] = (tokens[b,j] > 0): it is
    # row-constant, so keep only a (B,1,S) additive key bias (0 keep / -1e9 mask).
    attn_bias = jnp.where(tokens > 0, jnp.float32(0.0),
                          jnp.float32(_NEG_INF))[:, None, :]

    # BERTEmbedding: token + positional + segment (plain XLA gathers). Its
    # LayerNorm is fused into the first attention kernel; dropout = identity.
    x = (jnp.take(params["token_emb"], tokens, axis=0)
         + positional_encoding(S, H)[None, :, :]
         + jnp.take(params["segment_emb"], segment_label, axis=0))

    pre_ln = (params["emb_ln_a"], params["emb_ln_b"])
    for li, lp in enumerate(params["layers"]):
        x = attention_sublayer(x, attn_bias, pre_ln, (lp["ln1_a"], lp["ln1_b"]),
                               lp, attn_heads, fuse_pre_ln=(li == 0))
        x = ffn_sublayer(x, lp)

    # QA head: tiny (H, 2) projection done in plain XLA (lane width 2 would
    # force masked partial stores and <2% MXU use in a Pallas kernel).
    logits = (jnp.einsum('bsh,hc->bsc', x.astype(jnp.float32), params["qa_w"])
              + params["qa_b"])
    start_logits = logits[..., 0]                 # split(1, dim=-1) + squeeze(-1)
    end_logits = logits[..., 1]
    return start_logits, end_logits


# TODO(synk): dropout layers and the ipdb.set_trace() debug hooks in the
# reference module are no-ops here (inference semantics / debugger hooks).


if __name__ == "__main__":
    VOCAB = 32
    HIDDEN = 32
    N_LAYERS = 2
    HEADS = 4
    B, S = 2, 8

    key = jax.random.PRNGKey(0)
    k_tok, k_param = jax.random.split(key)

    tokens = jax.random.randint(k_tok, (B, S), 1, VOCAB, dtype=jnp.int32)
    tokens = tokens.at[:, -2:].set(0)   # some padding to exercise the key mask
    segment_label = jnp.concatenate(
        [jnp.zeros((B, S // 2), jnp.int32), jnp.ones((B, S - S // 2), jnp.int32)],
        axis=1)

    params = init_params(k_param, VOCAB, HIDDEN, N_LAYERS, HEADS)

    start_logits, end_logits = squad_weight_mapper_forward(
        params, tokens, segment_label, HEADS)
    jax.block_until_ready((start_logits, end_logits))

    assert start_logits.shape == (B, S) and end_logits.shape == (B, S)
    assert bool(jnp.all(jnp.isfinite(start_logits)))
    assert bool(jnp.all(jnp.isfinite(end_logits)))
    print("KERNEL_OK")
</pallas_src>

<mosaic_0001>
module attributes {stable_mosaic.version = 11 : i64} {
  func.func @k(%arg0: i32, %arg1: memref<8x128xf32, #tpu.memory_space<vmem>>, %arg2: memref<8x128xf32, #tpu.memory_space<vmem>>, %arg3: memref<8x128xf32, #tpu.memory_space<vmem>>) attributes {dimension_semantics = [#tpu.dimension_semantics<arbitrary>], iteration_bounds = array<i64: 2>, scalar_prefetch = 0 : i64, scratch_operands = 0 : i64, tpu.core_type = #tpu.core_type<tc>, window_params = [{pipeline_mode = #tpu.pipeline_mode<synchronous>, transform_indices = @transform_0, window_bounds = array<i64: 8, 128>}, {transform_indices = @transform_1, window_bounds = array<i64: 8, 128>}, {transform_indices = @transform_2, window_bounds = array<i64: 8, 128>}]} {
    %c0 = arith.constant 0 : index
    %c0_0 = arith.constant 0 : index
    %0 = vector.load %arg2[%c0, %c0_0] : memref<8x128xf32, #tpu.memory_space<vmem>>, vector<8x128xf32>
    %c0_1 = arith.constant 0 : index
    %c0_2 = arith.constant 0 : index
    %1 = vector.load %arg1[%c0_1, %c0_2] : memref<8x128xf32, #tpu.memory_space<vmem>>, vector<8x128xf32>
    %2 = arith.addf %0, %1 : vector<8x128xf32>
    %c0_3 = arith.constant 0 : index
    %c0_4 = arith.constant 0 : index
    %3 = vector.load %arg3[%c0_3, %c0_4] : memref<8x128xf32, #tpu.memory_space<vmem>>, vector<8x128xf32>
    tpu.vector_store %arg3[%c0_3, %c0_4], %2 {strides = array<i32>} : memref<8x128xf32, #tpu.memory_space<vmem>>, vector<8x128xf32>,
    return
  }
  func.func @transform_0(%arg0: i32) -> (i32, i32) {
    %c0_i32 = arith.constant 0 : i32
    %c0_i32_0 = arith.constant 0 : i32
    %c0_i32_1 = arith.constant 0 : i32
    return %c0_i32, %c0_i32_0 : i32, i32
  }
  func.func @transform_1(%arg0: i32) -> (i32, i32) {
    %c0_i32 = arith.constant 0 : i32
    %c0_i32_0 = arith.constant 0 : i32
    return %arg0, %c0_i32 : i32, i32
  }
  func.func @transform_2(%arg0: i32) -> (i32, i32) {
    %c0_i32 = arith.constant 0 : i32
    %c0_i32_0 = arith.constant 0 : i32
    return %arg0, %c0_i32 : i32, i32
  }
}

module attributes {stable_mosaic.version = 11 : i64} {
  func.func @attn_sublayer_kernel(%arg0: i32, %arg1: i32, %arg2: memref<1x8x32xf32, #tpu.memory_space<vmem>>, %arg3: memref<1x1x8xf32, #tpu.memory_space<vmem>>, %arg4: memref<1x32xf32, #tpu.memory_space<vmem>>, %arg5: memref<1x32xf32, #tpu.memory_space<vmem>>, %arg6: memref<1x32xf32, #tpu.memory_space<vmem>>, %arg7: memref<1x32xf32, #tpu.memory_space<vmem>>, %arg8: memref<32x32xbf16, #tpu.memory_space<vmem>>, %arg9: memref<1x32xf32, #tpu.memory_space<vmem>>, %arg10: memref<32x32xbf16, #tpu.memory_space<vmem>>, %arg11: memref<1x32xf32, #tpu.memory_space<vmem>>, %arg12: memref<32x32xbf16, #tpu.memory_space<vmem>>, %arg13: memref<1x32xf32, #tpu.memory_space<vmem>>, %arg14: memref<32x32xbf16, #tpu.memory_space<vmem>>, %arg15: memref<1x32xf32, #tpu.memory_space<vmem>>, %arg16: memref<1x8x32xbf16, #tpu.memory_space<vmem>>) attributes {dimension_semantics = [#tpu.dimension_semantics<parallel>, #tpu.dimension_semantics<parallel>], iteration_bounds = array<i64: 2, 1>, scalar_prefetch = 0 : i64, scratch_operands = 0 : i64, tpu.core_type = #tpu.core_type<tc>, window_params = [{transform_indices = @transform_0, window_bounds = array<i64: 1, 8, 32>}, {transform_indices = @transform_1, window_bounds = array<i64: 1, 1, 8>}, {pipeline_mode = #tpu.pipeline_mode<synchronous>, transform_indices = @transform_2, window_bounds = array<i64: 1, 32>}, {pipeline_mode = #tpu.pipeline_mode<synchronous>, transform_indices = @transform_3, window_bounds = array<i64: 1, 32>}, {pipeline_mode = #tpu.pipeline_mode<synchronous>, transform_indices = @transform_4, window_bounds = array<i64: 1, 32>}, {pipeline_mode = #tpu.pipeline_mode<synchronous>, transform_indices = @transform_5, window_bounds = array<i64: 1, 32>}, {pipeline_mode = #tpu.pipeline_mode<synchronous>, transform_indices = @transform_6, window_bounds = array<i64: 32, 32>}, {pipeline_mode = #tpu.pipeline_mode<synchronous>, transform_indices = @transform_7, window_bounds = array<i64: 1, 32>}, {pipeline_mode = #tpu.pipeline_mode<synchronous>, transform_indices = @transform_8, window_bounds = array<i64: 32, 32>}, {pipeline_mode = #tpu.pipeline_mode<synchronous>, transform_indices = @transform_9, window_bounds = array<i64: 1, 32>}, {pipeline_mode = #tpu.pipeline_mode<synchronous>, transform_indices = @transform_10, window_bounds = array<i64: 32, 32>}, {pipeline_mode = #tpu.pipeline_mode<synchronous>, transform_indices = @transform_11, window_bounds = array<i64: 1, 32>}, {pipeline_mode = #tpu.pipeline_mode<synchronous>, transform_indices = @transform_12, window_bounds = array<i64: 32, 32>}, {pipeline_mode = #tpu.pipeline_mode<synchronous>, transform_indices = @transform_13, window_bounds = array<i64: 1, 32>}, {transform_indices = @transform_14, window_bounds = array<i64: 1, 8, 32>}]} {
    %c0 = arith.constant 0 : index
    %c0_0 = arith.constant 0 : index
    %c0_1 = arith.constant 0 : index
    %0 = vector.load %arg2[%c0, %c0_0, %c0_1] : memref<1x8x32xf32, #tpu.memory_space<vmem>>, vector<1x8x32xf32>
    %1 = vector.shape_cast %0 : vector<1x8x32xf32> to vector<8x32xf32>
    %c0_2 = arith.constant 0 : index
    %c0_3 = arith.constant 0 : index
    %2 = vector.load %arg4[%c0_2, %c0_3] : memref<1x32xf32, #tpu.memory_space<vmem>>, vector<1x32xf32>
    %c0_4 = arith.constant 0 : index
    %c0_5 = arith.constant 0 : index
    %3 = vector.load %arg5[%c0_4, %c0_5] : memref<1x32xf32, #tpu.memory_space<vmem>>, vector<1x32xf32>
    %cst = arith.constant dense<0.000000e+00> : vector<8xf32>
    %4 = vector.multi_reduction <add>, %1, %cst [1] : vector<8x32xf32> to vector<8xf32>
    %5 = vector.shape_cast %4 : vector<8xf32> to vector<8x1xf32>
    %cst_6 = arith.constant 3.200000e+01 : f32
    %6 = vector.broadcast %cst_6 : f32 to vector<8x1xf32>
    %7 = arith.divf %5, %6 : vector<8x1xf32>
    %8 = vector.broadcast %7 : vector<8x1xf32> to vector<8x32xf32>
    %9 = arith.subf %1, %8 : vector<8x32xf32>
    %10 = arith.mulf %9, %9 : vector<8x32xf32>
    %cst_7 = arith.constant dense<0.000000e+00> : vector<8xf32>
    %11 = vector.multi_reduction <add>, %10, %cst_7 [1] : vector<8x32xf32> to vector<8xf32>
    %12 = vector.shape_cast %11 : vector<8xf32> to vector<8x1xf32>
    %cst_8 = arith.constant 0.0322580636 : f32
    %13 = vector.broadcast %cst_8 : f32 to vector<8x1xf32>
    %14 = arith.mulf %12, %13 : vector<8x1xf32>
    %15 = math.sqrt %14 : vector<8x1xf32>
    %cst_9 = arith.constant 9.99999997E-7 : f32
    %16 = vector.broadcast %cst_9 : f32 to vector<8x1xf32>
    %17 = arith.addf %15, %16 : vector<8x1xf32>
    %18 = tpu.reciprocal %17 {approx = true} : vector<8x1xf32> -> vector<8x1xf32>
    %19 = vector.broadcast %7 : vector<8x1xf32> to vector<8x32xf32>
    %20 = arith.subf %1, %19 : vector<8x32xf32>
    %21 = vector.broadcast %2 : vector<1x32xf32> to vector<8x32xf32>
    %22 = arith.mulf %21, %20 : vector<8x32xf32>
    %23 = vector.broadcast %18 : vector<8x1xf32> to vector<8x32xf32>
    %24 = arith.mulf %22, %23 : vector<8x32xf32>
    %25 = vector.broadcast %3 : vector<1x32xf32> to vector<8x32xf32>
    %26 = arith.addf %24, %25 : vector<8x32xf32>
    %c0_10 = arith.constant 0 : index
    %c0_11 = arith.constant 0 : index
    %27 = vector.load %arg6[%c0_10, %c0_11] : memref<1x32xf32, #tpu.memory_space<vmem>>, vector<1x32xf32>
    %c0_12 = arith.constant 0 : index
    %c0_13 = arith.constant 0 : index
    %28 = vector.load %arg7[%c0_12, %c0_13] : memref<1x32xf32, #tpu.memory_space<vmem>>, vector<1x32xf32>
    %cst_14 = arith.constant dense<0.000000e+00> : vector<8xf32>
    %29 = vector.multi_reduction <add>, %26, %cst_14 [1] : vector<8x32xf32> to vector<8xf32>
    %30 = vector.shape_cast %29 : vector<8xf32> to vector<8x1xf32>
    %cst_15 = arith.constant 3.200000e+01 : f32
    %31 = vector.broadcast %cst_15 : f32 to vector<8x1xf32>
    %32 = arith.divf %30, %31 : vector<8x1xf32>
    %33 = vector.broadcast %32 : vector<8x1xf32> to vector<8x32xf32>
    %34 = arith.subf %26, %33 : vector<8x32xf32>
    %35 = arith.mulf %34, %34 : vector<8x32xf32>
    %cst_16 = arith.constant dense<0.000000e+00> : vector<8xf32>
    %36 = vector.multi_reduction <add>, %35, %cst_16 [1] : vector<8x32xf32> to vector<8xf32>
    %37 = vector.shape_cast %36 : vector<8xf32> to vector<8x1xf32>
    %cst_17 = arith.constant 0.0322580636 : f32
    %38 = vector.broadcast %cst_17 : f32 to vector<8x1xf32>
    %39 = arith.mulf %37, %38 : vector<8x1xf32>
    %40 = math.sqrt %39 : vector<8x1xf32>
    %cst_18 = arith.constant 9.99999997E-7 : f32
    %41 = vector.broadcast %cst_18 : f32 to vector<8x1xf32>
    %42 = arith.addf %40, %41 : vector<8x1xf32>
    %43 = tpu.reciprocal %42 {approx = true} : vector<8x1xf32> -> vector<8x1xf32>
    %44 = vector.broadcast %32 : vector<8x1xf32> to vector<8x32xf32>
    %45 = arith.subf %26, %44 : vector<8x32xf32>
    %46 = vector.broadcast %27 : vector<1x32xf32> to vector<8x32xf32>
    %47 = arith.mulf %46, %45 : vector<8x32xf32>
    %48 = vector.broadcast %43 : vector<8x1xf32> to vector<8x32xf32>
    %49 = arith.mulf %47, %48 : vector<8x32xf32>
    %50 = vector.broadcast %28 : vector<1x32xf32> to vector<8x32xf32>
    %51 = arith.addf %49, %50 : vector<8x32xf32>
    %52 = arith.truncf %51 : vector<8x32xf32> to vector<8x32xbf16>
    %c0_19 = arith.constant 0 : index
    %c0_20 = arith.constant 0 : index
    %53 = vector.load %arg8[%c0_19, %c0_20] : memref<32x32xbf16, #tpu.memory_space<vmem>>, vector<32x32xbf16>
    %cst_21 = arith.constant dense<0.000000e+00> : vector<8x32xf32>
    %54 = tpu.matmul %52, %53, %cst_21 {dimension_numbers = #tpu.dot_dimension_numbers<[1], [0], [0], [1], [0, 0, 1, 1], [], []>} : vector<8x32xbf16>, vector<32x32xbf16>, vector<8x32xf32> -> vector<8x32xf32>
    %c0_22 = arith.constant 0 : index
    %c0_23 = arith.constant 0 : index
    %55 = vector.load %arg9[%c0_22, %c0_23] : memref<1x32xf32, #tpu.memory_space<vmem>>, vector<1x32xf32>
    %56 = vector.broadcast %55 : vector<1x32xf32> to vector<8x32xf32>
    %57 = arith.addf %54, %56 : vector<8x32xf32>
    %c0_24 = arith.constant 0 : index
    %c0_25 = arith.constant 0 : index
    %58 = vector.load %arg10[%c0_24, %c0_25] : memref<32x32xbf16, #tpu.memory_space<vmem>>, vector<32x32xbf16>
    %cst_26 = arith.constant dense<0.000000e+00> : vector<8x32xf32>
    %59 = tpu.matmul %52, %58, %cst_26 {dimension_numbers = #tpu.dot_dimension_numbers<[1], [0], [0], [1], [0, 0, 1, 1], [], []>} : vector<8x32xbf16>, vector<32x32xbf16>, vector<8x32xf32> -> vector<8x32xf32>
    %c0_27 = arith.constant 0 : index
    %c0_28 = arith.constant 0 : index
    %60 = vector.load %arg11[%c0_27, %c0_28] : memref<1x32xf32, #tpu.memory_space<vmem>>, vector<1x32xf32>
    %61 = vector.broadcast %60 : vector<1x32xf32> to vector<8x32xf32>
    %62 = arith.addf %59, %61 : vector<8x32xf32>
    %c0_29 = arith.constant 0 : index
    %c0_30 = arith.constant 0 : index
    %63 = vector.load %arg12[%c0_29, %c0_30] : memref<32x32xbf16, #tpu.memory_space<vmem>>, vector<32x32xbf16>
    %cst_31 = arith.constant dense<0.000000e+00> : vector<8x32xf32>
    %64 = tpu.matmul %52, %63, %cst_31 {dimension_numbers = #tpu.dot_dimension_numbers<[1], [0], [0], [1], [0, 0, 1, 1], [], []>} : vector<8x32xbf16>, vector<32x32xbf16>, vector<8x32xf32> -> vector<8x32xf32>
    %c0_32 = arith.constant 0 : index
    %c0_33 = arith.constant 0 : index
    %65 = vector.load %arg13[%c0_32, %c0_33] : memref<1x32xf32, #tpu.memory_space<vmem>>, vector<1x32xf32>
    %66 = vector.broadcast %65 : vector<1x32xf32> to vector<8x32xf32>
    %67 = arith.addf %64, %66 : vector<8x32xf32>
    %cst_34 = arith.constant 0.353553385 : f32
    %68 = vector.broadcast %cst_34 : f32 to vector<8x32xf32>
    %69 = arith.mulf %57, %68 : vector<8x32xf32>
    %70 = vector.extract_strided_slice %69 {offsets = [0, 0], sizes = [8, 8], strides = [1, 1]} : vector<8x32xf32> to vector<8x8xf32>
    %71 = vector.extract_strided_slice %69 {offsets = [0, 8], sizes = [8, 8], strides = [1, 1]} : vector<8x32xf32> to vector<8x8xf32>
    %72 = vector.extract_strided_slice %69 {offsets = [0, 16], sizes = [8, 8], strides = [1, 1]} : vector<8x32xf32> to vector<8x8xf32>
    %73 = vector.extract_strided_slice %69 {offsets = [0, 24], sizes = [8, 8], strides = [1, 1]} : vector<8x32xf32> to vector<8x8xf32>
    %74 = vector.shape_cast %70 : vector<8x8xf32> to vector<1x8x8xf32>
    %75 = vector.shape_cast %71 : vector<8x8xf32> to vector<1x8x8xf32>
    %76 = vector.shape_cast %72 : vector<8x8xf32> to vector<1x8x8xf32>
    %77 = vector.shape_cast %73 : vector<8x8xf32> to vector<1x8x8xf32>
    %78 = tpu.concatenate %74, %75, %76, %77 in 0 : vector<1x8x8xf32>, vector<1x8x8xf32>, vector<1x8x8xf32>, vector<1x8x8xf32> -> vector<4x8x8xf32>
    %79 = arith.truncf %78 : vector<4x8x8xf32> to vector<4x8x8xbf16>
    %80 = vector.extract_strided_slice %62 {offsets = [0, 0], sizes = [8, 8], strides = [1, 1]} : vector<8x32xf32> to vector<8x8xf32>
    %81 = vector.extract_strided_slice %62 {offsets = [0, 8], sizes = [8, 8], strides = [1, 1]} : vector<8x32xf32> to vector<8x8xf32>
    %82 = vector.extract_strided_slice %62 {offsets = [0, 16], sizes = [8, 8], strides = [1, 1]} : vector<8x32xf32> to vector<8x8xf32>
    %83 = vector.extract_strided_slice %62 {offsets = [0, 24], sizes = [8, 8], strides = [1, 1]} : vector<8x32xf32> to vector<8x8xf32>
    %84 = vector.shape_cast %80 : vector<8x8xf32> to vector<1x8x8xf32>
    %85 = vector.shape_cast %81 : vector<8x8xf32> to vector<1x8x8xf32>
    %86 = vector.shape_cast %82 : vector<8x8xf32> to vector<1x8x8xf32>
    %87 = vector.shape_cast %83 : vector<8x8xf32> to vector<1x8x8xf32>
    %88 = tpu.concatenate %84, %85, %86, %87 in 0 : vector<1x8x8xf32>, vector<1x8x8xf32>, vector<1x8x8xf32>, vector<1x8x8xf32> -> vector<4x8x8xf32>
    %89 = arith.truncf %88 : vector<4x8x8xf32> to vector<4x8x8xbf16>
    %90 = vector.extract_strided_slice %67 {offsets = [0, 0], sizes = [8, 8], strides = [1, 1]} : vector<8x32xf32> to vector<8x8xf32>
    %91 = vector.extract_strided_slice %67 {offsets = [0, 8], sizes = [8, 8], strides = [1, 1]} : vector<8x32xf32> to vector<8x8xf32>
    %92 = vector.extract_strided_slice %67 {offsets = [0, 16], sizes = [8, 8], strides = [1, 1]} : vector<8x32xf32> to vector<8x8xf32>
    %93 = vector.extract_strided_slice %67 {offsets = [0, 24], sizes = [8, 8], strides = [1, 1]} : vector<8x32xf32> to vector<8x8xf32>
    %94 = vector.shape_cast %90 : vector<8x8xf32> to vector<1x8x8xf32>
    %95 = vector.shape_cast %91 : vector<8x8xf32> to vector<1x8x8xf32>
    %96 = vector.shape_cast %92 : vector<8x8xf32> to vector<1x8x8xf32>
    %97 = vector.shape_cast %93 : vector<8x8xf32> to vector<1x8x8xf32>
    %98 = tpu.concatenate %94, %95, %96, %97 in 0 : vector<1x8x8xf32>, vector<1x8x8xf32>, vector<1x8x8xf32>, vector<1x8x8xf32> -> vector<4x8x8xf32>
    %99 = arith.truncf %98 : vector<4x8x8xf32> to vector<4x8x8xbf16>
    "tpu.trace_start"() <{level = 10 : i32, message = "hqd,hkd->hqk"}> : () -> ()
    %cst_35 = arith.constant dense<0.000000e+00> : vector<4x8x8xf32>
    %100 = tpu.matmul %79, %89, %cst_35 {dimension_numbers = #tpu.dot_dimension_numbers<[2], [2], [1], [1], [0, 0, 0, 1, 1, 1], [0], [0]>} : vector<4x8x8xbf16>, vector<4x8x8xbf16>, vector<4x8x8xf32> -> vector<4x8x8xf32>
    "tpu.trace_stop"() : () -> ()
    %c0_36 = arith.constant 0 : index
    %c0_37 = arith.constant 0 : index
    %c0_38 = arith.constant 0 : index
    %101 = vector.load %arg3[%c0_36, %c0_37, %c0_38] : memref<1x1x8xf32, #tpu.memory_space<vmem>>, vector<1x1x8xf32>
    %102 = vector.shape_cast %101 : vector<1x1x8xf32> to vector<1x8xf32>
    %103 = vector.shape_cast %102 : vector<1x8xf32> to vector<1x1x8xf32>
    %104 = vector.broadcast %103 : vector<1x1x8xf32> to vector<4x8x8xf32>
    %105 = arith.addf %100, %104 : vector<4x8x8xf32>
    %cst_39 = arith.constant dense<0xFF800000> : vector<4x8xf32>
    %106 = vector.multi_reduction <maximumf>, %105, %cst_39 [2] : vector<4x8x8xf32> to vector<4x8xf32>
    %107 = vector.shape_cast %106 : vector<4x8xf32> to vector<4x8x1xf32>
    %108 = vector.broadcast %107 : vector<4x8x1xf32> to vector<4x8x8xf32>
    %109 = arith.subf %105, %108 : vector<4x8x8xf32>
    %110 = math.exp %109 : vector<4x8x8xf32>
    %cst_40 = arith.constant dense<0.000000e+00> : vector<4x8xf32>
    %111 = vector.multi_reduction <add>, %110, %cst_40 [2] : vector<4x8x8xf32> to vector<4x8xf32>
    %112 = vector.shape_cast %111 : vector<4x8xf32> to vector<4x8x1xf32>
    %113 = arith.truncf %110 : vector<4x8x8xf32> to vector<4x8x8xbf16>
    "tpu.trace_start"() <{level = 10 : i32, message = "hqk,hkd->hqd"}> : () -> ()
    %cst_41 = arith.constant dense<0.000000e+00> : vector<4x8x8xf32>
    %114 = tpu.matmul %113, %99, %cst_41 {dimension_numbers = #tpu.dot_dimension_numbers<[2], [1], [1], [2], [0, 0, 0, 1, 1, 2], [0], [0]>} : vector<4x8x8xbf16>, vector<4x8x8xbf16>, vector<4x8x8xf32> -> vector<4x8x8xf32>
    "tpu.trace_stop"() : () -> ()
    %115 = tpu.reciprocal %112 {approx = true} : vector<4x8x1xf32> -> vector<4x8x1xf32>
    %116 = vector.broadcast %115 : vector<4x8x1xf32> to vector<4x8x8xf32>
    %117 = arith.mulf %114, %116 : vector<4x8x8xf32>
    %118 = vector.extract_strided_slice %117 {offsets = [0, 0, 0], sizes = [1, 8, 8], strides = [1, 1, 1]} : vector<4x8x8xf32> to vector<1x8x8xf32>
    %119 = vector.shape_cast %118 : vector<1x8x8xf32> to vector<8x8xf32>
    %120 = vector.extract_strided_slice %117 {offsets = [1, 0, 0], sizes = [1, 8, 8], strides = [1, 1, 1]} : vector<4x8x8xf32> to vector<1x8x8xf32>
    %121 = vector.shape_cast %120 : vector<1x8x8xf32> to vector<8x8xf32>
    %122 = vector.extract_strided_slice %117 {offsets = [2, 0, 0], sizes = [1, 8, 8], strides = [1, 1, 1]} : vector<4x8x8xf32> to vector<1x8x8xf32>
    %123 = vector.shape_cast %122 : vector<1x8x8xf32> to vector<8x8xf32>
    %124 = vector.extract_strided_slice %117 {offsets = [3, 0, 0], sizes = [1, 8, 8], strides = [1, 1, 1]} : vector<4x8x8xf32> to vector<1x8x8xf32>
    %125 = vector.shape_cast %124 : vector<1x8x8xf32> to vector<8x8xf32>
    %126 = tpu.concatenate %119, %121, %123, %125 in 1 : vector<8x8xf32>, vector<8x8xf32>, vector<8x8xf32>, vector<8x8xf32> -> vector<8x32xf32>
    %127 = arith.truncf %126 : vector<8x32xf32> to vector<8x32xbf16>
    %c0_42 = arith.constant 0 : index
    %c0_43 = arith.constant 0 : index
    %128 = vector.load %arg14[%c0_42, %c0_43] : memref<32x32xbf16, #tpu.memory_space<vmem>>, vector<32x32xbf16>
    %cst_44 = arith.constant dense<0.000000e+00> : vector<8x32xf32>
    %129 = tpu.matmul %127, %128, %cst_44 {dimension_numbers = #tpu.dot_dimension_numbers<[1], [0], [0], [1], [0, 0, 1, 1], [], []>} : vector<8x32xbf16>, vector<32x32xbf16>, vector<8x32xf32> -> vector<8x32xf32>
    %c0_45 = arith.constant 0 : index
    %c0_46 = arith.constant 0 : index
    %130 = vector.load %arg15[%c0_45, %c0_46] : memref<1x32xf32, #tpu.memory_space<vmem>>, vector<1x32xf32>
    %131 = vector.broadcast %130 : vector<1x32xf32> to vector<8x32xf32>
    %132 = arith.addf %129, %131 : vector<8x32xf32>
    %133 = arith.addf %26, %132 : vector<8x32xf32>
    %134 = arith.truncf %133 : vector<8x32xf32> to vector<8x32xbf16>
    %c0_47 = arith.constant 0 : index
    %c0_48 = arith.constant 0 : index
    %c0_49 = arith.constant 0 : index
    %135 = vector.load %arg16[%c0_47, %c0_48, %c0_49] : memref<1x8x32xbf16, #tpu.memory_space<vmem>>, vector<1x8x32xbf16>
    %136 = vector.shape_cast %135 : vector<1x8x32xbf16> to vector<8x32xbf16>
    %137 = vector.shape_cast %134 : vector<8x32xbf16> to vector<1x8x32xbf16>
    tpu.vector_store %arg16[%c0_47, %c0_48, %c0_49], %137 {strides = array<i32>} : memref<1x8x32xbf16, #tpu.memory_space<vmem>>, vector<1x8x32xbf16>,
    return
  }
  func.func @transform_0(%arg0: i32, %arg1: i32) -> (i32, i32, i32) {
    %c0_i32 = arith.constant 0 : i32
    %c0_i32_0 = arith.constant 0 : i32
    %c0_i32_1 = arith.constant 0 : i32
    return %arg0, %c0_i32, %c0_i32_0 : i32, i32, i32
  }
  func.func @transform_1(%arg0: i32, %arg1: i32) -> (i32, i32, i32) {
    %c0_i32 = arith.constant 0 : i32
    %c0_i32_0 = arith.constant 0 : i32
    %c0_i32_1 = arith.constant 0 : i32
    return %arg0, %c0_i32, %c0_i32_0 : i32, i32, i32
  }
  func.func @transform_2(%arg0: i32, %arg1: i32) -> (i32, i32) {
    %c0_i32 = arith.constant 0 : i32
    %c0_i32_0 = arith.constant 0 : i32
    %c0_i32_1 = arith.constant 0 : i32
    return %c0_i32, %c0_i32_0 : i32, i32
  }
  func.func @transform_3(%arg0: i32, %arg1: i32) -> (i32, i32) {
    %c0_i32 = arith.constant 0 : i32
    %c0_i32_0 = arith.constant 0 : i32
    %c0_i32_1 = arith.constant 0 : i32
    return %c0_i32, %c0_i32_0 : i32, i32
  }
  func.func @transform_4(%arg0: i32, %arg1: i32) -> (i32, i32) {
    %c0_i32 = arith.constant 0 : i32
    %c0_i32_0 = arith.constant 0 : i32
    %c0_i32_1 = arith.constant 0 : i32
    return %c0_i32, %c0_i32_0 : i32, i32
  }
  func.func @transform_5(%arg0: i32, %arg1: i32) -> (i32, i32) {
    %c0_i32 = arith.constant 0 : i32
    %c0_i32_0 = arith.constant 0 : i32
    %c0_i32_1 = arith.constant 0 : i32
    return %c0_i32, %c0_i32_0 : i32, i32
  }
  func.func @transform_6(%arg0: i32, %arg1: i32) -> (i32, i32) {
    %c0_i32 = arith.constant 0 : i32
    %c0_i32_0 = arith.constant 0 : i32
    %c0_i32_1 = arith.constant 0 : i32
    return %c0_i32, %c0_i32_0 : i32, i32
  }
  func.func @transform_7(%arg0: i32, %arg1: i32) -> (i32, i32) {
    %c0_i32 = arith.constant 0 : i32
    %c0_i32_0 = arith.constant 0 : i32
    %c0_i32_1 = arith.constant 0 : i32
    return %c0_i32, %c0_i32_0 : i32, i32
  }
  func.func @transform_8(%arg0: i32, %arg1: i32) -> (i32, i32) {
    %c0_i32 = arith.constant 0 : i32
    %c0_i32_0 = arith.constant 0 : i32
    %c0_i32_1 = arith.constant 0 : i32
    return %c0_i32, %c0_i32_0 : i32, i32
  }
  func.func @transform_9(%arg0: i32, %arg1: i32) -> (i32, i32) {
    %c0_i32 = arith.constant 0 : i32
    %c0_i32_0 = arith.constant 0 : i32
    %c0_i32_1 = arith.constant 0 : i32
    return %c0_i32, %c0_i32_0 : i32, i32
  }
  func.func @transform_10(%arg0: i32, %arg1: i32) -> (i32, i32) {
    %c0_i32 = arith.constant 0 : i32
    %c0_i32_0 = arith.constant 0 : i32
    %c0_i32_1 = arith.constant 0 : i32
    return %c0_i32, %c0_i32_0 : i32, i32
  }
  func.func @transform_11(%arg0: i32, %arg1: i32) -> (i32, i32) {
    %c0_i32 = arith.constant 0 : i32
    %c0_i32_0 = arith.constant 0 : i32
    %c0_i32_1 = arith.constant 0 : i32
    return %c0_i32, %c0_i32_0 : i32, i32
  }
  func.func @transform_12(%arg0: i32, %arg1: i32) -> (i32, i32) {
    %c0_i32 = arith.constant 0 : i32
    %c0_i32_0 = arith.constant 0 : i32
    %c0_i32_1 = arith.constant 0 : i32
    return %c0_i32, %c0_i32_0 : i32, i32
  }
  func.func @transform_13(%arg0: i32, %arg1: i32) -> (i32, i32) {
    %c0_i32 = arith.constant 0 : i32
    %c0_i32_0 = arith.constant 0 : i32
    %c0_i32_1 = arith.constant 0 : i32
    return %c0_i32, %c0_i32_0 : i32, i32
  }
  func.func @transform_14(%arg0: i32, %arg1: i32) -> (i32, i32, i32) {
    %c0_i32 = arith.constant 0 : i32
    %c0_i32_0 = arith.constant 0 : i32
    return %arg0, %arg1, %c0_i32 : i32, i32, i32
  }
}

</mosaic_0001>

<llo_original>
// kernel: tpu_custom_call.1
$region0: #{tpu_custom_call.1}
  #allocation0 [shape = 'u32[]', space=smem, size = 0x4, offset = 0x4, fixed_abs, tag = 'smem constant byte address 0x4 - core index']
  #allocation1 [shape = 'u32[144,128]{1,0:T(1,128)}', space=vmem, size = 0x12000, scoped, tag = 'internal scratch']
  %s0 = inlined_call_operand.hbm [shape: f32[8,128], index: 0, kind: input, shape index: {}]
  %s1 = inlined_call_operand.hbm [shape: f32[16,128], index: 1, kind: input, shape index: {}]
  %s2 = inlined_call_operand.hbm [shape: f32[16,128], index: 2, kind: output, shape index: {}]
  %s3 = sld [smem:[#allocation0]]
  $region49: #{tpu_custom_call.1} parent=0
    _
  %s5 = ssub.s32 1, %s3
  %s6 = scalar_select 0, %s5, %s3
  $region1: #{tpu_custom_call.1} parent=0
    #allocation2 [shape = 'u8[4096]{0}', space=vmem, size = 0x1000, scoped, tag = 'input window, operand 0, single buffered']
    #allocation3 [shape = 's32[2]{0}', space=sflag, size = 0x8, scoped, tag = 'scoped memory for tpu_custom_call.1']
    #allocation4 [shape = 's32[2]{0}', space=sflag, size = 0x8, scoped, tag = 'scoped memory for tpu_custom_call.1']
    #allocation5 [shape = 'u8[8192]{0}', space=vmem, size = 0x2000, scoped, tag = 'input window, operand 1']
    #allocation6 [shape = 's32[2]{0}', space=sflag, size = 0x8, scoped, tag = 'scoped memory for tpu_custom_call.1']
    #allocation7 [shape = 'u8[8192]{0}', space=vmem, size = 0x2000, scoped, tag = 'output window, operand 0']
    %7 = vsyncpa [#allocation3], 0
    %8 = vsyncpa [#allocation6], 0
    %s9 = scalar_lea.sflag [#allocation6], 1
    %10 = vsyncpa %s9, 0
    %11 = vsyncpa [#allocation4], 0
    %s12 = scalar_lea.sflag [#allocation4], 1
    %13 = vsyncpa %s12, 0
    loop: start=0, step=1, limit=4
    $region2: #{tpu_custom_call.1} parent=1 // loop_pre_header
      _
    $region3: #{tpu_custom_call.1} parent=1 // loop_header
      %s15 = sphi 0, %s19
      %p16 = scmp.ge.s32.totalorder %s15, 4
      %s23 = sphi 0, %s23
      %s25 = sphi 0, %s23
      %s26 = sphi 0, %s25
      %s40 = sphi 0, %s26
      %s46 = sphi 0, %s48
      %s49 = sphi 0, %s46
      %s50 = sphi 0, %s49
      %s66 = sphi 0, %s50
      %s72 = sphi 0, %s74
      %s75 = sphi 0, %s72
      %s76 = sphi 0, %s75
      %s92 = sphi 0, %s76
    $region4: #{tpu_custom_call.1} parent=1 // loop_header_branch
      %18 = sbr.rel (%p16) target = $region8
    $region5: #{tpu_custom_call.1} parent=1 // loop_body
      %s20 = ssub.s32 %s15, 1
      %s21 = ssub.s32 %s15, 2
      %s22 = sadd.s32 %s15, 1
      %s24 = sadd.s32 %s23, 1
      %p27 = scmp.eq.s32.totalorder %s15, 1
      %p28 = scmp.ne.s32.totalorder %s23, %s25
      %p29 = scmp.eq.s32.totalorder %s15, 0
      %p30 = por %p28, %p29
      %p31 = scmp.ne.s32.totalorder %s23, %s25
      %p32 = scmp.eq.s32.totalorder %s20, 1
      %p33 = por %p31, %p32
      %p34 = scmp.ne.s32.totalorder %s25, %s26
      %p35 = scmp.eq.s32.totalorder %s20, 0
      %p36 = por %p34, %p35
      %p37 = scmp.ne.s32.totalorder %s25, %s26
      %p38 = scmp.eq.s32.totalorder %s21, 1
      %p39 = por %p37, %p38
      %p41 = scmp.ne.s32.totalorder %s26, %s40
      %p42 = scmp.eq.s32.totalorder %s21, 0
      %p43 = por %p41, %p42
      %s44 = ssub.s32 %s15, %s22
      %p45 = scmp.eq.s32.totalorder %s44, 0
      %s47 = sadd.s32 %s46, 1
      %s48 = scalar_select %p45, %s46, %s47
      %p51 = pneg %p45
      %p52 = scmp.eq.s32.totalorder %s15, 1
      %p53 = por %p51, %p52
      %p54 = scmp.ne.s32.totalorder %s46, %s49
      %p55 = scmp.eq.s32.totalorder %s15, 0
      %p56 = por %p54, %p55
      %p57 = scmp.ne.s32.totalorder %s46, %s49
      %p58 = scmp.eq.s32.totalorder %s20, 1
      %p59 = por %p57, %p58
      %p60 = scmp.ne.s32.totalorder %s49, %s50
      %p61 = scmp.eq.s32.totalorder %s20, 0
      %p62 = por %p60, %p61
      %p63 = scmp.ne.s32.totalorder %s49, %s50
      %p64 = scmp.eq.s32.totalorder %s21, 1
      %p65 = por %p63, %p64
      %p67 = scmp.ne.s32.totalorder %s50, %s66
      %p68 = scmp.eq.s32.totalorder %s21, 0
      %p69 = por %p67, %p68
      %s70 = ssub.s32 %s15, %s22
      %p71 = scmp.eq.s32.totalorder %s70, 0
      %s73 = sadd.s32 %s72, 1
      %s74 = scalar_select %p71, %s72, %s73
      %p77 = pneg %p71
      %p78 = scmp.eq.s32.totalorder %s15, 1
      %p79 = por %p77, %p78
      %p80 = scmp.ne.s32.totalorder %s72, %s75
      %p81 = scmp.eq.s32.totalorder %s15, 0
      %p82 = por %p80, %p81
      %p83 = scmp.ne.s32.totalorder %s72, %s75
      %p84 = scmp.eq.s32.totalorder %s20, 1
      %p85 = por %p83, %p84
      %p86 = scmp.ne.s32.totalorder %s75, %s76
      %p87 = scmp.eq.s32.totalorder %s20, 0
      %p88 = por %p86, %p87
      %p89 = scmp.ne.s32.totalorder %s75, %s76
      %p90 = scmp.eq.s32.totalorder %s21, 1
      %p91 = por %p89, %p90
      %p93 = scmp.ne.s32.totalorder %s76, %s92
      %p94 = scmp.eq.s32.totalorder %s21, 0
      %p95 = por %p93, %p94
      %p96 = scmp.le.s32.totalorder 1, %s15
      %p97 = scmp.lt.s32.totalorder %s15, 3
      %p98 = pnand %p96, %p97
      %p99 = pneg %p98
      // Predicated region
      $region9: #{tpu_custom_call.1} parent=5 // pred_check
        _
      $region10: #{tpu_custom_call.1} parent=5 // pred_check_branch
        %101 = sbr.rel (%p98) target = $region12
      $region11: #{tpu_custom_call.1} parent=5 // pred_region
        %s102 = ssub.s32 %s15, 1
        // Predicated region
        $region13: #{tpu_custom_call.1} parent=11 // pred_check
          %p103 = pneg %p36
        $region14: #{tpu_custom_call.1} parent=11 // pred_check_branch
          %105 = sbr.rel (%p103) target = $region16
        $region15: #{tpu_custom_call.1} parent=11 // pred_region
          %s107 = ssub.s32 128, 128
          %108 = vsyncadd [#allocation3], %s107
          %s110 = sshll.u32 [#allocation2], 4
          %s111 = int_to_ptr.vmem [resolvable:$true] %s110
          %113 = dma.hbm_to_vmem [thread:$0]  %s0, 128, %s111, [#allocation3]
        $region16: #{tpu_custom_call.1} parent=11 // pred_fallthru
          _
      $region12: #{tpu_custom_call.1} parent=5 // pred_fallthru
        _
      %p114 = scmp.lt.s32.totalorder %s15, 2
      // Predicated region
      $region17: #{tpu_custom_call.1} parent=5 // pred_check
        %p115 = pneg %p114
      $region18: #{tpu_custom_call.1} parent=5 // pred_check_branch
        %117 = sbr.rel (%p115) target = $region20
      $region19: #{tpu_custom_call.1} parent=5 // pred_region
        // Predicated region
        $region21: #{tpu_custom_call.1} parent=19 // pred_check
          %p118 = pneg %p56
        $region22: #{tpu_custom_call.1} parent=19 // pred_check_branch
          %120 = sbr.rel (%p118) target = $region24
        $region23: #{tpu_custom_call.1} parent=19 // pred_region
          %s121 = sand.u32 %s46, 1
          %s122 = scalar_lea.sflag [#allocation6], %s121
          %s123 = sand.u32 %s46, 1
          %s124 = smul.addr %s123, 8
          %s125 = scalar_lea.vmem [#allocation5], %s124
          %s127 = ssub.s32 128, 128
          %128 = vsyncadd %s122, %s127
          %s129 = smul.addr %s15, 128
          %s130 = scalar_lea.hbm %s1, %s129
          %s132 = sshll.u32 %s125, 4
          %s133 = int_to_ptr.vmem [resolvable:$true] %s132
          %135 = dma.hbm_to_vmem [thread:$0]  %s130, 128, %s133, %s122
        $region24: #{tpu_custom_call.1} parent=19 // pred_fallthru
          _
      $region20: #{tpu_custom_call.1} parent=5 // pred_fallthru
        _
      %p136 = scmp.le.s32.totalorder 1, %s15
      %p137 = scmp.lt.s32.totalorder %s15, 3
      %p138 = pnand %p136, %p137
      %p139 = pneg %p138
      // Predicated region
      $region25: #{tpu_custom_call.1} parent=5 // pred_check
        _
      $region26: #{tpu_custom_call.1} parent=5 // pred_check_branch
        %141 = sbr.rel (%p138) target = $region28
      $region27: #{tpu_custom_call.1} parent=5 // pred_region
        %s142 = ssub.s32 %s15, 1
        // Predicated region
        $region29: #{tpu_custom_call.1} parent=27 // pred_check
          %p143 = pneg %p36
        $region30: #{tpu_custom_call.1} parent=27 // pred_check_branch
          %145 = sbr.rel (%p143) target = $region32
        $region31: #{tpu_custom_call.1} parent=27 // pred_region
          %146 = dma.done [#allocation3], 128
        $region32: #{tpu_custom_call.1} parent=27 // pred_fallthru
          _
        %s147 = sand.u32 %s49, 1
        %s148 = scalar_lea.sflag [#allocation6], %s147
        %s149 = sand.u32 %s49, 1
        %s150 = smul.addr %s149, 8
        %s151 = scalar_lea.vmem [#allocation5], %s150
        // Predicated region
        $region33: #{tpu_custom_call.1} parent=27 // pred_check
          %p152 = pneg %p62
        $region34: #{tpu_custom_call.1} parent=27 // pred_check_branch
          %154 = sbr.rel (%p152) target = $region36
        $region35: #{tpu_custom_call.1} parent=27 // pred_region
          %155 = dma.done %s148, 128
        $region36: #{tpu_custom_call.1} parent=27 // pred_fallthru
          _
        %p156 = pneg %p36
        %p157 = pneg %p33
        %s158 = sand.u32 %s49, 1
        %s159 = scalar_lea.sflag [#allocation6], %s158
        %s160 = sand.u32 %s49, 1
        %s161 = smul.addr %s160, 8
        %s162 = scalar_lea.vmem [#allocation5], %s161
        %p163 = pneg %p62
        %p164 = pneg %p59
        %p165 = pneg %p88
        %p166 = pneg %p85
        %s167 = sand.u32 %s75, 1
        %s168 = scalar_lea.sflag [#allocation4], %s167
        %s169 = sand.u32 %s75, 1
        %s170 = smul.addr %s169, 8
        %s171 = scalar_lea.vmem [#allocation7], %s170
        %v172 = vld [vmem:[%s151] sm:$0xff]
        %v173 = vld [vmem:[#allocation2] sm:$0xff]
        %v174 = vadd.f32 %v172, %v173
        %175 = vst [vmem:[%s171] sm:$0xff] %v174
        %s176 = sand.u32 %s75, 1
        %s177 = scalar_lea.sflag [#allocation4], %s176
        %s178 = sand.u32 %s75, 1
        %s179 = smul.addr %s178, 8
        %s180 = scalar_lea.vmem [#allocation7], %s179
        // Predicated region
        $region37: #{tpu_custom_call.1} parent=27 // pred_check
          %p181 = pneg %p85
        $region38: #{tpu_custom_call.1} parent=27 // pred_check_branch
          %183 = sbr.rel (%p181) target = $region40
        $region39: #{tpu_custom_call.1} parent=27 // pred_region
          %s185 = ssub.s32 128, 128
          %186 = vsyncadd %s177, %s185
          %s187 = smul.addr %s20, 128
          %s188 = scalar_lea.hbm %s2, %s187
          %s190 = sshll.u32 %s180, 4
          %s191 = int_to_ptr.vmem [resolvable:$true] %s190
          %193 = dma.vmem_to_hbm [thread:$0]  %s191, 128, %s188, %s177
        $region40: #{tpu_custom_call.1} parent=27 // pred_fallthru
          _
      $region28: #{tpu_custom_call.1} parent=5 // pred_fallthru
        _
      %p194 = scmp.le.s32.totalorder 2, %s15
      // Predicated region
      $region41: #{tpu_custom_call.1} parent=5 // pred_check
        %p195 = pneg %p194
      $region42: #{tpu_custom_call.1} parent=5 // pred_check_branch
        %197 = sbr.rel (%p195) target = $region44
      $region43: #{tpu_custom_call.1} parent=5 // pred_region
        %s198 = ssub.s32 %s15, 2
        // Predicated region
        $region45: #{tpu_custom_call.1} parent=43 // pred_check
          %p199 = pneg %p91
        $region46: #{tpu_custom_call.1} parent=43 // pred_check_branch
          %201 = sbr.rel (%p199) target = $region48
        $region47: #{tpu_custom_call.1} parent=43 // pred_region
          %s202 = sand.u32 %s76, 1
          %s203 = scalar_lea.sflag [#allocation4], %s202
          %s204 = sand.u32 %s76, 1
          %s205 = smul.addr %s204, 8
          %s206 = scalar_lea.vmem [#allocation7], %s205
          %207 = dma.done %s203, 128
        $region48: #{tpu_custom_call.1} parent=43 // pred_fallthru
          _
      $region44: #{tpu_custom_call.1} parent=5 // pred_fallthru
        _
    $region6: #{tpu_custom_call.1} parent=1 // loop_footer
      %s19 = sadd.s32 1, %s15
    $region7: #{tpu_custom_call.1} parent=1 // loop_footer_branch
      %14 = sbr.rel target = $region3
    $region8: #{tpu_custom_call.1} parent=1 // loop_exit
      _
    %208 = vsyncpa [#allocation3], 1
    %s209 = scalar_lea.sflag [#allocation3], 1
    %210 = vsyncpa %s209, 1
    %211 = vsyncpa [#allocation6], 1
    %s212 = scalar_lea.sflag [#allocation6], 1
    %213 = vsyncpa %s212, 1
    %214 = vsyncpa [#allocation4], 1
    %s215 = scalar_lea.sflag [#allocation4], 1
    %216 = vsyncpa %s215, 1

// kernel: tpu_custom_call.1
$region0: #{tpu_custom_call.1}
  #allocation0 [shape = 'u32[]', space=smem, size = 0x4, offset = 0x4, fixed_abs, tag = 'smem constant byte address 0x4 - core index']
  #allocation1 [shape = 'u32[144,128]{1,0:T(1,128)}', space=vmem, size = 0x12000, scoped, tag = 'internal scratch']
  %s0 = inlined_call_operand.hbm [shape: f32[2,8,32], index: 0, kind: input, shape index: {}]
  %s1 = inlined_call_operand.hbm [shape: f32[2,1,8], index: 1, kind: input, shape index: {}]
  %s2 = inlined_call_operand.hbm [shape: f32[1,32], index: 2, kind: input, shape index: {}]
  %s3 = inlined_call_operand.hbm [shape: f32[1,32], index: 3, kind: input, shape index: {}]
  %s4 = inlined_call_operand.hbm [shape: f32[1,32], index: 4, kind: input, shape index: {}]
  %s5 = inlined_call_operand.hbm [shape: f32[1,32], index: 5, kind: input, shape index: {}]
  %s6 = inlined_call_operand.hbm [shape: bf16[32,32], index: 6, kind: input, shape index: {}]
  %s7 = inlined_call_operand.hbm [shape: f32[1,32], index: 7, kind: input, shape index: {}]
  %s8 = inlined_call_operand.hbm [shape: bf16[32,32], index: 8, kind: input, shape index: {}]
  %s9 = inlined_call_operand.hbm [shape: f32[1,32], index: 9, kind: input, shape index: {}]
  %s10 = inlined_call_operand.hbm [shape: bf16[32,32], index: 10, kind: input, shape index: {}]
  %s11 = inlined_call_operand.hbm [shape: f32[1,32], index: 11, kind: input, shape index: {}]
  %s12 = inlined_call_operand.hbm [shape: bf16[32,32], index: 12, kind: input, shape index: {}]
  %s13 = inlined_call_operand.hbm [shape: f32[1,32], index: 13, kind: input, shape index: {}]
  %s14 = inlined_call_operand.hbm [shape: bf16[2,8,32], index: 14, kind: output, shape index: {}]
  %s15 = sld [smem:[#allocation0]]
  $region145: #{tpu_custom_call.1} parent=0
    _
  %s17 = ssub.s32 1, %s15
  %s18 = scalar_select 0, %s17, %s15
  $region1: #{tpu_custom_call.1} parent=0
    #allocation2 [shape = 'u8[8192]{0}', space=vmem, size = 0x2000, scoped, tag = 'input window, operand 0']
    #allocation3 [shape = 's32[2]{0}', space=sflag, size = 0x8, scoped, tag = 'scoped memory for tpu_custom_call.1']
    #allocation4 [shape = 's32[2]{0}', space=sflag, size = 0x8, scoped, tag = 'scoped memory for tpu_custom_call.1']
    #allocation5 [shape = 'u8[1024]{0}', space=vmem, size = 0x400, scoped, tag = 'input window, operand 1']
    #allocation6 [shape = 's32[2]{0}', space=sflag, size = 0x8, scoped, tag = 'scoped memory for tpu_custom_call.1']
    #allocation7 [shape = 'u8[512]{0}', space=vmem, size = 0x400, scoped, tag = 'input window, operand 2, single buffered']
    #allocation8 [shape = 'u8[512]{0}', space=vmem, size = 0x400, scoped, tag = 'input window, operand 3, single buffered']
    #allocation9 [shape = 's32[1]{0}', space=sflag, size = 0x4, scoped, tag = 'scoped memory for tpu_custom_call.1']
    #allocation10 [shape = 'u8[512]{0}', space=vmem, size = 0x400, scoped, tag = 'input window, operand 4, single buffered']
    #allocation11 [shape = 'u8[512]{0}', space=vmem, size = 0x400, scoped, tag = 'input window, operand 5, single buffered']
    #allocation12 [shape = 's32[1]{0}', space=sflag, size = 0x4, scoped, tag = 'scoped memory for tpu_custom_call.1']
    #allocation13 [shape = 'u8[8192]{0}', space=vmem, size = 0x2000, scoped, tag = 'input window, operand 6, single buffered']
    #allocation14 [shape = 'u8[512]{0}', space=vmem, size = 0x400, scoped, tag = 'input window, operand 7, single buffered']
    #allocation15 [shape = 's32[1]{0}', space=sflag, size = 0x4, scoped, tag = 'scoped memory for tpu_custom_call.1']
    #allocation16 [shape = 'u8[8192]{0}', space=vmem, size = 0x2000, scoped, tag = 'input window, operand 8, single buffered']
    #allocation17 [shape = 'u8[512]{0}', space=vmem, size = 0x400, scoped, tag = 'input window, operand 9, single buffered']
    #allocation18 [shape = 's32[1]{0}', space=sflag, size = 0x4, scoped, tag = 'scoped memory for tpu_custom_call.1']
    #allocation19 [shape = 'u8[8192]{0}', space=vmem, size = 0x2000, scoped, tag = 'input window, operand 10, single buffered']
    #allocation20 [shape = 'u8[512]{0}', space=vmem, size = 0x400, scoped, tag = 'input window, operand 11, single buffered']
    #allocation21 [shape = 's32[1]{0}', space=sflag, size = 0x4, scoped, tag = 'scoped memory for tpu_custom_call.1']
    #allocation22 [shape = 'u8[8192]{0}', space=vmem, size = 0x2000, scoped, tag = 'input window, operand 12, single buffered']
    #allocation23 [shape = 'u8[512]{0}', space=vmem, size = 0x400, scoped, tag = 'input window, operand 13, single buffered']
    #allocation24 [shape = 's32[1]{0}', space=sflag, size = 0x4, scoped, tag = 'scoped memory for tpu_custom_call.1']
    #allocation25 [shape = 'u8[4096]{0}', space=vmem, size = 0x1000, scoped, tag = 'output window, operand 0']
    %19 = vsyncpa [#allocation3], 0
    %s20 = scalar_lea.sflag [#allocation3], 1
    %21 = vsyncpa %s20, 0
    %22 = vsyncpa [#allocation6], 0
    %s23 = scalar_lea.sflag [#allocation6], 1
    %24 = vsyncpa %s23, 0
    %25 = vsyncpa [#allocation9], 0
    %26 = vsyncpa [#allocation12], 0
    %27 = vsyncpa [#allocation15], 0
    %28 = vsyncpa [#allocation18], 0
    %29 = vsyncpa [#allocation21], 0
    %30 = vsyncpa [#allocation24], 0
    %31 = vsyncpa [#allocation4], 0
    %s32 = scalar_lea.sflag [#allocation4], 1
    %33 = vsyncpa %s32, 0
    loop: start=0, step=1, limit=4
    $region2: #{tpu_custom_call.1} parent=1 // loop_pre_header
      _
    $region3: #{tpu_custom_call.1} parent=1 // loop_header
      %s35 = sphi 0, %s39
      %p36 = scmp.ge.s32.totalorder %s35, 4
      %s42 = sphi 0, %s54
      %s43 = sphi 0, %s50
      %s44 = sphi 0, %s42
      %s45 = sphi 0, %s43
      %s46 = sphi 0, %s44
      %s47 = sphi 0, %s45
      %s57 = sphi 0, %s59
      %s60 = sphi 0, %s57
      %s61 = sphi 0, %s60
      %s77 = sphi 0, %s61
      %s83 = sphi 0, %s85
      %s86 = sphi 0, %s83
      %s87 = sphi 0, %s86
      %s103 = sphi 0, %s87
      %s107 = sphi 0, %s107
      %s109 = sphi 0, %s107
      %s110 = sphi 0, %s109
      %s124 = sphi 0, %s110
      %s128 = sphi 0, %s128
      %s130 = sphi 0, %s128
      %s131 = sphi 0, %s130
      %s145 = sphi 0, %s131
      %s149 = sphi 0, %s149
      %s151 = sphi 0, %s149
      %s152 = sphi 0, %s151
      %s166 = sphi 0, %s152
      %s170 = sphi 0, %s170
      %s172 = sphi 0, %s170
      %s173 = sphi 0, %s172
      %s187 = sphi 0, %s173
      %s191 = sphi 0, %s191
      %s193 = sphi 0, %s191
      %s194 = sphi 0, %s193
      %s208 = sphi 0, %s194
      %s212 = sphi 0, %s212
      %s214 = sphi 0, %s212
      %s215 = sphi 0, %s214
      %s229 = sphi 0, %s215
      %s233 = sphi 0, %s233
      %s235 = sphi 0, %s233
      %s236 = sphi 0, %s235
      %s250 = sphi 0, %s236
      %s254 = sphi 0, %s254
      %s256 = sphi 0, %s254
      %s257 = sphi 0, %s256
      %s271 = sphi 0, %s257
      %s275 = sphi 0, %s275
      %s277 = sphi 0, %s275
      %s278 = sphi 0, %s277
      %s292 = sphi 0, %s278
      %s296 = sphi 0, %s296
      %s298 = sphi 0, %s296
      %s299 = sphi 0, %s298
      %s313 = sphi 0, %s299
      %s317 = sphi 0, %s317
      %s319 = sphi 0, %s317
      %s320 = sphi 0, %s319
      %s334 = sphi 0, %s320
      %s338 = sphi 0, %s338
      %s340 = sphi 0, %s338
      %s341 = sphi 0, %s340
      %s355 = sphi 0, %s341
      %s363 = sphi 0, %s365
      %s366 = sphi 0, %s363
      %s367 = sphi 0, %s366
      %s383 = sphi 0, %s367
    $region4: #{tpu_custom_call.1} parent=1 // loop_header_branch
      %38 = sbr.rel (%p36) target = $region8
    $region5: #{tpu_custom_call.1} parent=1 // loop_body
      %s40 = ssub.s32 %s35, 1
      %s41 = ssub.s32 %s35, 2
      %s48 = sadd.s32 1, %s43
      %p49 = scmp.ge.s32.totalorder %s48, 1
      %s50 = scalar_select %p49, 0, %s48
      %s51 = sadd.s32 1, %s42
      %s52 = scalar_select %p49, %s51, %s42
      %p53 = scmp.ge.s32.totalorder %s52, 2
      %s54 = scalar_select %p53, 0, %s52
      %s55 = ssub.s32 %s42, %s54
      %p56 = scmp.eq.s32.totalorder %s55, 0
      %s58 = sadd.s32 %s57, 1
      %s59 = scalar_select %p56, %s57, %s58
      %p62 = pneg %p56
      %p63 = scmp.eq.s32.totalorder %s35, 1
      %p64 = por %p62, %p63
      %p65 = scmp.ne.s32.totalorder %s57, %s60
      %p66 = scmp.eq.s32.totalorder %s35, 0
      %p67 = por %p65, %p66
      %p68 = scmp.ne.s32.totalorder %s57, %s60
      %p69 = scmp.eq.s32.totalorder %s40, 1
      %p70 = por %p68, %p69
      %p71 = scmp.ne.s32.totalorder %s60, %s61
      %p72 = scmp.eq.s32.totalorder %s40, 0
      %p73 = por %p71, %p72
      %p74 = scmp.ne.s32.totalorder %s60, %s61
      %p75 = scmp.eq.s32.totalorder %s41, 1
      %p76 = por %p74, %p75
      %p78 = scmp.ne.s32.totalorder %s61, %s77
      %p79 = scmp.eq.s32.totalorder %s41, 0
      %p80 = por %p78, %p79
      %s81 = ssub.s32 %s42, %s54
      %p82 = scmp.eq.s32.totalorder %s81, 0
      %s84 = sadd.s32 %s83, 1
      %s85 = scalar_select %p82, %s83, %s84
      %p88 = pneg %p82
      %p89 = scmp.eq.s32.totalorder %s35, 1
      %p90 = por %p88, %p89
      %p91 = scmp.ne.s32.totalorder %s83, %s86
      %p92 = scmp.eq.s32.totalorder %s35, 0
      %p93 = por %p91, %p92
      %p94 = scmp.ne.s32.totalorder %s83, %s86
      %p95 = scmp.eq.s32.totalorder %s40, 1
      %p96 = por %p94, %p95
      %p97 = scmp.ne.s32.totalorder %s86, %s87
      %p98 = scmp.eq.s32.totalorder %s40, 0
      %p99 = por %p97, %p98
      %p100 = scmp.ne.s32.totalorder %s86, %s87
      %p101 = scmp.eq.s32.totalorder %s41, 1
      %p102 = por %p100, %p101
      %p104 = scmp.ne.s32.totalorder %s87, %s103
      %p105 = scmp.eq.s32.totalorder %s41, 0
      %p106 = por %p104, %p105
      %s108 = sadd.s32 %s107, 1
      %p111 = scmp.eq.s32.totalorder %s35, 1
      %p112 = scmp.ne.s32.totalorder %s107, %s109
      %p113 = scmp.eq.s32.totalorder %s35, 0
      %p114 = por %p112, %p113
      %p115 = scmp.ne.s32.totalorder %s107, %s109
      %p116 = scmp.eq.s32.totalorder %s40, 1
      %p117 = por %p115, %p116
      %p118 = scmp.ne.s32.totalorder %s109, %s110
      %p119 = scmp.eq.s32.totalorder %s40, 0
      %p120 = por %p118, %p119
      %p121 = scmp.ne.s32.totalorder %s109, %s110
      %p122 = scmp.eq.s32.totalorder %s41, 1
      %p123 = por %p121, %p122
      %p125 = scmp.ne.s32.totalorder %s110, %s124
      %p126 = scmp.eq.s32.totalorder %s41, 0
      %p127 = por %p125, %p126
      %s129 = sadd.s32 %s128, 1
      %p132 = scmp.eq.s32.totalorder %s35, 1
      %p133 = scmp.ne.s32.totalorder %s128, %s130
      %p134 = scmp.eq.s32.totalorder %s35, 0
      %p135 = por %p133, %p134
      %p136 = scmp.ne.s32.totalorder %s128, %s130
      %p137 = scmp.eq.s32.totalorder %s40, 1
      %p138 = por %p136, %p137
      %p139 = scmp.ne.s32.totalorder %s130, %s131
      %p140 = scmp.eq.s32.totalorder %s40, 0
      %p141 = por %p139, %p140
      %p142 = scmp.ne.s32.totalorder %s130, %s131
      %p143 = scmp.eq.s32.totalorder %s41, 1
      %p144 = por %p142, %p143
      %p146 = scmp.ne.s32.totalorder %s131, %s145
      %p147 = scmp.eq.s32.totalorder %s41, 0
      %p148 = por %p146, %p147
      %s150 = sadd.s32 %s149, 1
      %p153 = scmp.eq.s32.totalorder %s35, 1
      %p154 = scmp.ne.s32.totalorder %s149, %s151
      %p155 = scmp.eq.s32.totalorder %s35, 0
      %p156 = por %p154, %p155
      %p157 = scmp.ne.s32.totalorder %s149, %s151
      %p158 = scmp.eq.s32.totalorder %s40, 1
      %p159 = por %p157, %p158
      %p160 = scmp.ne.s32.totalorder %s151, %s152
      %p161 = scmp.eq.s32.totalorder %s40, 0
      %p162 = por %p160, %p161
      %p163 = scmp.ne.s32.totalorder %s151, %s152
      %p164 = scmp.eq.s32.totalorder %s41, 1
      %p165 = por %p163, %p164
      %p167 = scmp.ne.s32.totalorder %s152, %s166
      %p168 = scmp.eq.s32.totalorder %s41, 0
      %p169 = por %p167, %p168
      %s171 = sadd.s32 %s170, 1
      %p174 = scmp.eq.s32.totalorder %s35, 1
      %p175 = scmp.ne.s32.totalorder %s170, %s172
      %p176 = scmp.eq.s32.totalorder %s35, 0
      %p177 = por %p175, %p176
      %p178 = scmp.ne.s32.totalorder %s170, %s172
      %p179 = scmp.eq.s32.totalorder %s40, 1
      %p180 = por %p178, %p179
      %p181 = scmp.ne.s32.totalorder %s172, %s173
      %p182 = scmp.eq.s32.totalorder %s40, 0
      %p183 = por %p181, %p182
      %p184 = scmp.ne.s32.totalorder %s172, %s173
      %p185 = scmp.eq.s32.totalorder %s41, 1
      %p186 = por %p184, %p185
      %p188 = scmp.ne.s32.totalorder %s173, %s187
      %p189 = scmp.eq.s32.totalorder %s41, 0
      %p190 = por %p188, %p189
      %s192 = sadd.s32 %s191, 1
      %p195 = scmp.eq.s32.totalorder %s35, 1
      %p196 = scmp.ne.s32.totalorder %s191, %s193
      %p197 = scmp.eq.s32.totalorder %s35, 0
      %p198 = por %p196, %p197
      %p199 = scmp.ne.s32.totalorder %s191, %s193
      %p200 = scmp.eq.s32.totalorder %s40, 1
      %p201 = por %p199, %p200
      %p202 = scmp.ne.s32.totalorder %s193, %s194
      %p203 = scmp.eq.s32.totalorder %s40, 0
      %p204 = por %p202, %p203
      %p205 = scmp.ne.s32.totalorder %s193, %s194
      %p206 = scmp.eq.s32.totalorder %s41, 1
      %p207 = por %p205, %p206
      %p209 = scmp.ne.s32.totalorder %s194, %s208
      %p210 = scmp.eq.s32.totalorder %s41, 0
      %p211 = por %p209, %p210
      %s213 = sadd.s32 %s212, 1
      %p216 = scmp.eq.s32.totalorder %s35, 1
      %p217 = scmp.ne.s32.totalorder %s212, %s214
      %p218 = scmp.eq.s32.totalorder %s35, 0
      %p219 = por %p217, %p218
      %p220 = scmp.ne.s32.totalorder %s212, %s214
      %p221 = scmp.eq.s32.totalorder %s40, 1
      %p222 = por %p220, %p221
      %p223 = scmp.ne.s32.totalorder %s214, %s215
      %p224 = scmp.eq.s32.totalorder %s40, 0
      %p225 = por %p223, %p224
      %p226 = scmp.ne.s32.totalorder %s214, %s215
      %p227 = scmp.eq.s32.totalorder %s41, 1
      %p228 = por %p226, %p227
      %p230 = scmp.ne.s32.totalorder %s215, %s229
      %p231 = scmp.eq.s32.totalorder %s41, 0
      %p232 = por %p230, %p231
      %s234 = sadd.s32 %s233, 1
      %p237 = scmp.eq.s32.totalorder %s35, 1
      %p238 = scmp.ne.s32.totalorder %s233, %s235
      %p239 = scmp.eq.s32.totalorder %s35, 0
      %p240 = por %p238, %p239
      %p241 = scmp.ne.s32.totalorder %s233, %s235
      %p242 = scmp.eq.s32.totalorder %s40, 1
      %p243 = por %p241, %p242
      %p244 = scmp.ne.s32.totalorder %s235, %s236
      %p245 = scmp.eq.s32.totalorder %s40, 0
      %p246 = por %p244, %p245
      %p247 = scmp.ne.s32.totalorder %s235, %s236
      %p248 = scmp.eq.s32.totalorder %s41, 1
      %p249 = por %p247, %p248
      %p251 = scmp.ne.s32.totalorder %s236, %s250
      %p252 = scmp.eq.s32.totalorder %s41, 0
      %p253 = por %p251, %p252
      %s255 = sadd.s32 %s254, 1
      %p258 = scmp.eq.s32.totalorder %s35, 1
      %p259 = scmp.ne.s32.totalorder %s254, %s256
      %p260 = scmp.eq.s32.totalorder %s35, 0
      %p261 = por %p259, %p260
      %p262 = scmp.ne.s32.totalorder %s254, %s256
      %p263 = scmp.eq.s32.totalorder %s40, 1
      %p264 = por %p262, %p263
      %p265 = scmp.ne.s32.totalorder %s256, %s257
      %p266 = scmp.eq.s32.totalorder %s40, 0
      %p267 = por %p265, %p266
      %p268 = scmp.ne.s32.totalorder %s256, %s257
      %p269 = scmp.eq.s32.totalorder %s41, 1
      %p270 = por %p268, %p269
      %p272 = scmp.ne.s32.totalorder %s257, %s271
      %p273 = scmp.eq.s32.totalorder %s41, 0
      %p274 = por %p272, %p273
      %s276 = sadd.s32 %s275, 1
      %p279 = scmp.eq.s32.totalorder %s35, 1
      %p280 = scmp.ne.s32.totalorder %s275, %s277
      %p281 = scmp.eq.s32.totalorder %s35, 0
      %p282 = por %p280, %p281
      %p283 = scmp.ne.s32.totalorder %s275, %s277
      %p284 = scmp.eq.s32.totalorder %s40, 1
      %p285 = por %p283, %p284
      %p286 = scmp.ne.s32.totalorder %s277, %s278
      %p287 = scmp.eq.s32.totalorder %s40, 0
      %p288 = por %p286, %p287
      %p289 = scmp.ne.s32.totalorder %s277, %s278
      %p290 = scmp.eq.s32.totalorder %s41, 1
      %p291 = por %p289, %p290
      %p293 = scmp.ne.s32.totalorder %s278, %s292
      %p294 = scmp.eq.s32.totalorder %s41, 0
      %p295 = por %p293, %p294
      %s297 = sadd.s32 %s296, 1
      %p300 = scmp.eq.s32.totalorder %s35, 1
      %p301 = scmp.ne.s32.totalorder %s296, %s298
      %p302 = scmp.eq.s32.totalorder %s35, 0
      %p303 = por %p301, %p302
      %p304 = scmp.ne.s32.totalorder %s296, %s298
      %p305 = scmp.eq.s32.totalorder %s40, 1
      %p306 = por %p304, %p305
      %p307 = scmp.ne.s32.totalorder %s298, %s299
      %p308 = scmp.eq.s32.totalorder %s40, 0
      %p309 = por %p307, %p308
      %p310 = scmp.ne.s32.totalorder %s298, %s299
      %p311 = scmp.eq.s32.totalorder %s41, 1
      %p312 = por %p310, %p311
      %p314 = scmp.ne.s32.totalorder %s299, %s313
      %p315 = scmp.eq.s32.totalorder %s41, 0
      %p316 = por %p314, %p315
      %s318 = sadd.s32 %s317, 1
      %p321 = scmp.eq.s32.totalorder %s35, 1
      %p322 = scmp.ne.s32.totalorder %s317, %s319
      %p323 = scmp.eq.s32.totalorder %s35, 0
      %p324 = por %p322, %p323
      %p325 = scmp.ne.s32.totalorder %s317, %s319
      %p326 = scmp.eq.s32.totalorder %s40, 1
      %p327 = por %p325, %p326
      %p328 = scmp.ne.s32.totalorder %s319, %s320
      %p329 = scmp.eq.s32.totalorder %s40, 0
      %p330 = por %p328, %p329
      %p331 = scmp.ne.s32.totalorder %s319, %s320
      %p332 = scmp.eq.s32.totalorder %s41, 1
      %p333 = por %p331, %p332
      %p335 = scmp.ne.s32.totalorder %s320, %s334
      %p336 = scmp.eq.s32.totalorder %s41, 0
      %p337 = por %p335, %p336
      %s339 = sadd.s32 %s338, 1
      %p342 = scmp.eq.s32.totalorder %s35, 1
      %p343 = scmp.ne.s32.totalorder %s338, %s340
      %p344 = scmp.eq.s32.totalorder %s35, 0
      %p345 = por %p343, %p344
      %p346 = scmp.ne.s32.totalorder %s338, %s340
      %p347 = scmp.eq.s32.totalorder %s40, 1
      %p348 = por %p346, %p347
      %p349 = scmp.ne.s32.totalorder %s340, %s341
      %p350 = scmp.eq.s32.totalorder %s40, 0
      %p351 = por %p349, %p350
      %p352 = scmp.ne.s32.totalorder %s340, %s341
      %p353 = scmp.eq.s32.totalorder %s41, 1
      %p354 = por %p352, %p353
      %p356 = scmp.ne.s32.totalorder %s341, %s355
      %p357 = scmp.eq.s32.totalorder %s41, 0
      %p358 = por %p356, %p357
      %s359 = ssub.s32 %s42, %s54
      %s360 = ssub.s32 %s43, %s50
      %s361 = sor.u32 %s359, %s360
      %p362 = scmp.eq.s32.totalorder %s361, 0
      %s364 = sadd.s32 %s363, 1
      %s365 = scalar_select %p362, %s363, %s364
      %p368 = pneg %p362
      %p369 = scmp.eq.s32.totalorder %s35, 1
      %p370 = por %p368, %p369
      %p371 = scmp.ne.s32.totalorder %s363, %s366
      %p372 = scmp.eq.s32.totalorder %s35, 0
      %p373 = por %p371, %p372
      %p374 = scmp.ne.s32.totalorder %s363, %s366
      %p375 = scmp.eq.s32.totalorder %s40, 1
      %p376 = por %p374, %p375
      %p377 = scmp.ne.s32.totalorder %s366, %s367
      %p378 = scmp.eq.s32.totalorder %s40, 0
      %p379 = por %p377, %p378
      %p380 = scmp.ne.s32.totalorder %s366, %s367
      %p381 = scmp.eq.s32.totalorder %s41, 1
      %p382 = por %p380, %p381
      %p384 = scmp.ne.s32.totalorder %s367, %s383
      %p385 = scmp.eq.s32.totalorder %s41, 0
      %p386 = por %p384, %p385
      %p387 = scmp.le.s32.totalorder 1, %s35
      %p388 = scmp.lt.s32.totalorder %s35, 3
      %p389 = pnand %p387, %p388
      %p390 = pneg %p389
      // Predicated region
      $region9: #{tpu_custom_call.1} parent=5 // pred_check
        _
      $region10: #{tpu_custom_call.1} parent=5 // pred_check_branch
        %392 = sbr.rel (%p389) target = $region12
      $region11: #{tpu_custom_call.1} parent=5 // pred_region
        %s393 = ssub.s32 %s35, 1
        // Predicated region
        $region13: #{tpu_custom_call.1} parent=11 // pred_check
          %p394 = pneg %p120
        $region14: #{tpu_custom_call.1} parent=11 // pred_check_branch
          %396 = sbr.rel (%p394) target = $region16
        $region15: #{tpu_custom_call.1} parent=11 // pred_region
          %s398 = ssub.s32 16, 16
          %399 = vsyncadd [#allocation6], %s398
          %s401 = sshll.u32 [#allocation7], 4
          %s402 = int_to_ptr.vmem [resolvable:$true] %s401
          %404 = dma.hbm_to_vmem [thread:$0]  %s2, 16, %s402, [#allocation6]
        $region16: #{tpu_custom_call.1} parent=11 // pred_fallthru
          _
        // Predicated region
        $region17: #{tpu_custom_call.1} parent=11 // pred_check
          %p405 = pneg %p141
        $region18: #{tpu_custom_call.1} parent=11 // pred_check_branch
          %407 = sbr.rel (%p405) target = $region20
        $region19: #{tpu_custom_call.1} parent=11 // pred_region
          %s409 = ssub.s32 16, 16
          %410 = vsyncadd [#allocation9], %s409
          %s412 = sshll.u32 [#allocation8], 4
          %s413 = int_to_ptr.vmem [resolvable:$true] %s412
          %415 = dma.hbm_to_vmem [thread:$0]  %s3, 16, %s413, [#allocation9]
        $region20: #{tpu_custom_call.1} parent=11 // pred_fallthru
          _
        // Predicated region
        $region21: #{tpu_custom_call.1} parent=11 // pred_check
          %p416 = pneg %p162
        $region22: #{tpu_custom_call.1} parent=11 // pred_check_branch
          %418 = sbr.rel (%p416) target = $region24
        $region23: #{tpu_custom_call.1} parent=11 // pred_region
          %s420 = ssub.s32 16, 16
          %421 = vsyncadd [#allocation9], %s420
          %s423 = sshll.u32 [#allocation10], 4
          %s424 = int_to_ptr.vmem [resolvable:$true] %s423
          %426 = dma.hbm_to_vmem [thread:$0]  %s4, 16, %s424, [#allocation9]
        $region24: #{tpu_custom_call.1} parent=11 // pred_fallthru
          _
        // Predicated region
        $region25: #{tpu_custom_call.1} parent=11 // pred_check
          %p427 = pneg %p183
        $region26: #{tpu_custom_call.1} parent=11 // pred_check_branch
          %429 = sbr.rel (%p427) target = $region28
        $region27: #{tpu_custom_call.1} parent=11 // pred_region
          %s431 = ssub.s32 16, 16
          %432 = vsyncadd [#allocation12], %s431
          %s434 = sshll.u32 [#allocation11], 4
          %s435 = int_to_ptr.vmem [resolvable:$true] %s434
          %437 = dma.hbm_to_vmem [thread:$0]  %s5, 16, %s435, [#allocation12]
        $region28: #{tpu_custom_call.1} parent=11 // pred_fallthru
          _
        // Predicated region
        $region29: #{tpu_custom_call.1} parent=11 // pred_check
          %p438 = pneg %p204
        $region30: #{tpu_custom_call.1} parent=11 // pred_check_branch
          %440 = sbr.rel (%p438) target = $region32
        $region31: #{tpu_custom_call.1} parent=11 // pred_region
          %s442 = ssub.s32 256, 256
          %443 = vsyncadd [#allocation12], %s442
          %s444 = sshll.u32 [#allocation13], 4
          %s445 = int_to_ptr.vmem [resolvable:$true] %s444
          %450 = dma.hbm_to_vmem [thread:$0]  %s6, 256, %s445, [#allocation12], 64, 64, 4
        $region32: #{tpu_custom_call.1} parent=11 // pred_fallthru
          _
        // Predicated region
        $region33: #{tpu_custom_call.1} parent=11 // pred_check
          %p451 = pneg %p225
        $region34: #{tpu_custom_call.1} parent=11 // pred_check_branch
          %453 = sbr.rel (%p451) target = $region36
        $region35: #{tpu_custom_call.1} parent=11 // pred_region
          %s455 = ssub.s32 16, 16
          %456 = vsyncadd [#allocation15], %s455
          %s458 = sshll.u32 [#allocation14], 4
          %s459 = int_to_ptr.vmem [resolvable:$true] %s458
          %461 = dma.hbm_to_vmem [thread:$0]  %s7, 16, %s459, [#allocation15]
        $region36: #{tpu_custom_call.1} parent=11 // pred_fallthru
          _
        // Predicated region
        $region37: #{tpu_custom_call.1} parent=11 // pred_check
          %p462 = pneg %p246
        $region38: #{tpu_custom_call.1} parent=11 // pred_check_branch
          %464 = sbr.rel (%p462) target = $region40
        $region39: #{tpu_custom_call.1} parent=11 // pred_region
          %s466 = ssub.s32 256, 256
          %467 = vsyncadd [#allocation15], %s466
          %s468 = sshll.u32 [#allocation16], 4
          %s469 = int_to_ptr.vmem [resolvable:$true] %s468
          %474 = dma.hbm_to_vmem [thread:$0]  %s8, 256, %s469, [#allocation15], 64, 64, 4
        $region40: #{tpu_custom_call.1} parent=11 // pred_fallthru
          _
        // Predicated region
        $region41: #{tpu_custom_call.1} parent=11 // pred_check
          %p475 = pneg %p267
        $region42: #{tpu_custom_call.1} parent=11 // pred_check_branch
          %477 = sbr.rel (%p475) target = $region44
        $region43: #{tpu_custom_call.1} parent=11 // pred_region
          %s479 = ssub.s32 16, 16
          %480 = vsyncadd [#allocation18], %s479
          %s482 = sshll.u32 [#allocation17], 4
          %s483 = int_to_ptr.vmem [resolvable:$true] %s482
          %485 = dma.hbm_to_vmem [thread:$0]  %s9, 16, %s483, [#allocation18]
        $region44: #{tpu_custom_call.1} parent=11 // pred_fallthru
          _
        // Predicated region
        $region45: #{tpu_custom_call.1} parent=11 // pred_check
          %p486 = pneg %p288
        $region46: #{tpu_custom_call.1} parent=11 // pred_check_branch
          %488 = sbr.rel (%p486) target = $region48
        $region47: #{tpu_custom_call.1} parent=11 // pred_region
          %s490 = ssub.s32 256, 256
          %491 = vsyncadd [#allocation18], %s490
          %s492 = sshll.u32 [#allocation19], 4
          %s493 = int_to_ptr.vmem [resolvable:$true] %s492
          %498 = dma.hbm_to_vmem [thread:$0]  %s10, 256, %s493, [#allocation18], 64, 64, 4
        $region48: #{tpu_custom_call.1} parent=11 // pred_fallthru
          _
        // Predicated region
        $region49: #{tpu_custom_call.1} parent=11 // pred_check
          %p499 = pneg %p309
        $region50: #{tpu_custom_call.1} parent=11 // pred_check_branch
          %501 = sbr.rel (%p499) target = $region52
        $region51: #{tpu_custom_call.1} parent=11 // pred_region
          %s503 = ssub.s32 16, 16
          %504 = vsyncadd [#allocation21], %s503
          %s506 = sshll.u32 [#allocation20], 4
          %s507 = int_to_ptr.vmem [resolvable:$true] %s506
          %509 = dma.hbm_to_vmem [thread:$0]  %s11, 16, %s507, [#allocation21]
        $region52: #{tpu_custom_call.1} parent=11 // pred_fallthru
          _
        // Predicated region
        $region53: #{tpu_custom_call.1} parent=11 // pred_check
          %p510 = pneg %p330
        $region54: #{tpu_custom_call.1} parent=11 // pred_check_branch
          %512 = sbr.rel (%p510) target = $region56
        $region55: #{tpu_custom_call.1} parent=11 // pred_region
          %s514 = ssub.s32 256, 256
          %515 = vsyncadd [#allocation21], %s514
          %s516 = sshll.u32 [#allocation22], 4
          %s517 = int_to_ptr.vmem [resolvable:$true] %s516
          %522 = dma.hbm_to_vmem [thread:$0]  %s12, 256, %s517, [#allocation21], 64, 64, 4
        $region56: #{tpu_custom_call.1} parent=11 // pred_fallthru
          _
        // Predicated region
        $region57: #{tpu_custom_call.1} parent=11 // pred_check
          %p523 = pneg %p351
        $region58: #{tpu_custom_call.1} parent=11 // pred_check_branch
          %525 = sbr.rel (%p523) target = $region60
        $region59: #{tpu_custom_call.1} parent=11 // pred_region
          %s527 = ssub.s32 16, 16
          %528 = vsyncadd [#allocation24], %s527
          %s530 = sshll.u32 [#allocation23], 4
          %s531 = int_to_ptr.vmem [resolvable:$true] %s530
          %533 = dma.hbm_to_vmem [thread:$0]  %s13, 16, %s531, [#allocation24]
        $region60: #{tpu_custom_call.1} parent=11 // pred_fallthru
          _
      $region12: #{tpu_custom_call.1} parent=5 // pred_fallthru
        _
      %p534 = scmp.lt.s32.totalorder %s35, 2
      // Predicated region
      $region61: #{tpu_custom_call.1} parent=5 // pred_check
        %p535 = pneg %p534
      $region62: #{tpu_custom_call.1} parent=5 // pred_check_branch
        %537 = sbr.rel (%p535) target = $region64
      $region63: #{tpu_custom_call.1} parent=5 // pred_region
        // Predicated region
        $region65: #{tpu_custom_call.1} parent=63 // pred_check
          %p538 = pneg %p67
        $region66: #{tpu_custom_call.1} parent=63 // pred_check_branch
          %540 = sbr.rel (%p538) target = $region68
        $region67: #{tpu_custom_call.1} parent=63 // pred_region
          %s541 = sand.u32 %s57, 1
          %s542 = scalar_lea.sflag [#allocation3], %s541
          %s543 = sand.u32 %s57, 1
          %s544 = smul.addr %s543, 8
          %s545 = scalar_lea.vmem [#allocation2], %s544
          %s547 = ssub.s32 128, 128
          %548 = vsyncadd %s542, %s547
          %s549 = smul.addr %s42, 128
          %s550 = scalar_lea.hbm %s0, %s549
          %s552 = sshll.u32 %s545, 4
          %s553 = int_to_ptr.vmem [resolvable:$true] %s552
          %555 = dma.hbm_to_vmem [thread:$0]  %s550, 128, %s553, %s542
        $region68: #{tpu_custom_call.1} parent=63 // pred_fallthru
          _
        // Predicated region
        $region69: #{tpu_custom_call.1} parent=63 // pred_check
          %p556 = pneg %p93
        $region70: #{tpu_custom_call.1} parent=63 // pred_check_branch
          %558 = sbr.rel (%p556) target = $region72
        $region71: #{tpu_custom_call.1} parent=63 // pred_region
          %s559 = sand.u32 %s35, 1
          %s560 = scalar_lea.sflag [#allocation6], %s559
          %s561 = sand.u32 %s83, 1
          %s562 = scalar_lea.vmem [#allocation5], %s561
          %s564 = ssub.s32 16, 16
          %565 = vsyncadd %s560, %s564
          %s566 = smul.addr %s42, 16
          %s567 = scalar_lea.hbm %s1, %s566
          %s569 = sshll.u32 %s562, 4
          %s570 = int_to_ptr.vmem [resolvable:$true] %s569
          %572 = dma.hbm_to_vmem [thread:$0]  %s567, 16, %s570, %s560
        $region72: #{tpu_custom_call.1} parent=63 // pred_fallthru
          _
      $region64: #{tpu_custom_call.1} parent=5 // pred_fallthru
        _
      %p573 = scmp.le.s32.totalorder 1, %s35
      %p574 = scmp.lt.s32.totalorder %s35, 3
      %p575 = pnand %p573, %p574
      %p576 = pneg %p575
      // Predicated region
      $region73: #{tpu_custom_call.1} parent=5 // pred_check
        _
      $region74: #{tpu_custom_call.1} parent=5 // pred_check_branch
        %578 = sbr.rel (%p575) target = $region76
      $region75: #{tpu_custom_call.1} parent=5 // pred_region
        %s579 = ssub.s32 %s35, 1
        %s580 = sand.u32 %s60, 1
        %s581 = scalar_lea.sflag [#allocation3], %s580
        %s582 = sand.u32 %s60, 1
        %s583 = smul.addr %s582, 8
        %s584 = scalar_lea.vmem [#allocation2], %s583
        // Predicated region
        $region77: #{tpu_custom_call.1} parent=75 // pred_check
          %p585 = pneg %p73
        $region78: #{tpu_custom_call.1} parent=75 // pred_check_branch
          %587 = sbr.rel (%p585) target = $region80
        $region79: #{tpu_custom_call.1} parent=75 // pred_region
          %588 = dma.done %s581, 128
        $region80: #{tpu_custom_call.1} parent=75 // pred_fallthru
          _
        %s589 = sand.u32 %s40, 1
        %s590 = scalar_lea.sflag [#allocation6], %s589
        %s591 = sand.u32 %s86, 1
        %s592 = scalar_lea.vmem [#allocation5], %s591
        // Predicated region
        $region81: #{tpu_custom_call.1} parent=75 // pred_check
          %p593 = pneg %p99
        $region82: #{tpu_custom_call.1} parent=75 // pred_check_branch
          %595 = sbr.rel (%p593) target = $region84
        $region83: #{tpu_custom_call.1} parent=75 // pred_region
          %596 = dma.done %s590, 16
        $region84: #{tpu_custom_call.1} parent=75 // pred_fallthru
          _
        // Predicated region
        $region85: #{tpu_custom_call.1} parent=75 // pred_check
          %p597 = pneg %p120
        $region86: #{tpu_custom_call.1} parent=75 // pred_check_branch
          %599 = sbr.rel (%p597) target = $region88
        $region87: #{tpu_custom_call.1} parent=75 // pred_region
          %600 = dma.done [#allocation6], 16
        $region88: #{tpu_custom_call.1} parent=75 // pred_fallthru
          _
        // Predicated region
        $region89: #{tpu_custom_call.1} parent=75 // pred_check
          %p601 = pneg %p141
        $region90: #{tpu_custom_call.1} parent=75 // pred_check_branch
          %603 = sbr.rel (%p601) target = $region92
        $region91: #{tpu_custom_call.1} parent=75 // pred_region
          %604 = dma.done [#allocation9], 16
        $region92: #{tpu_custom_call.1} parent=75 // pred_fallthru
          _
        // Predicated region
        $region93: #{tpu_custom_call.1} parent=75 // pred_check
          %p605 = pneg %p162
        $region94: #{tpu_custom_call.1} parent=75 // pred_check_branch
          %607 = sbr.rel (%p605) target = $region96
        $region95: #{tpu_custom_call.1} parent=75 // pred_region
          %608 = dma.done [#allocation9], 16
        $region96: #{tpu_custom_call.1} parent=75 // pred_fallthru
          _
        // Predicated region
        $region97: #{tpu_custom_call.1} parent=75 // pred_check
          %p609 = pneg %p183
        $region98: #{tpu_custom_call.1} parent=75 // pred_check_branch
          %611 = sbr.rel (%p609) target = $region100
        $region99: #{tpu_custom_call.1} parent=75 // pred_region
          %612 = dma.done [#allocation12], 16
        $region100: #{tpu_custom_call.1} parent=75 // pred_fallthru
          _
        // Predicated region
        $region101: #{tpu_custom_call.1} parent=75 // pred_check
          %p613 = pneg %p204
        $region102: #{tpu_custom_call.1} parent=75 // pred_check_branch
          %615 = sbr.rel (%p613) target = $region104
        $region103: #{tpu_custom_call.1} parent=75 // pred_region
          %616 = dma.done [#allocation12], 256
        $region104: #{tpu_custom_call.1} parent=75 // pred_fallthru
          _
        // Predicated region
        $region105: #{tpu_custom_call.1} parent=75 // pred_check
          %p617 = pneg %p225
        $region106: #{tpu_custom_call.1} parent=75 // pred_check_branch
          %619 = sbr.rel (%p617) target = $region108
        $region107: #{tpu_custom_call.1} parent=75 // pred_region
          %620 = dma.done [#allocation15], 16
        $region108: #{tpu_custom_call.1} parent=75 // pred_fallthru
          _
        // Predicated region
        $region109: #{tpu_custom_call.1} parent=75 // pred_check
          %p621 = pneg %p246
        $region110: #{tpu_custom_call.1} parent=75 // pred_check_branch
          %623 = sbr.rel (%p621) target = $region112
        $region111: #{tpu_custom_call.1} parent=75 // pred_region
          %624 = dma.done [#allocation15], 256
        $region112: #{tpu_custom_call.1} parent=75 // pred_fallthru
          _
        // Predicated region
        $region113: #{tpu_custom_call.1} parent=75 // pred_check
          %p625 = pneg %p267
        $region114: #{tpu_custom_call.1} parent=75 // pred_check_branch
          %627 = sbr.rel (%p625) target = $region116
        $region115: #{tpu_custom_call.1} parent=75 // pred_region
          %628 = dma.done [#allocation18], 16
        $region116: #{tpu_custom_call.1} parent=75 // pred_fallthru
          _
        // Predicated region
        $region117: #{tpu_custom_call.1} parent=75 // pred_check
          %p629 = pneg %p288
        $region118: #{tpu_custom_call.1} parent=75 // pred_check_branch
          %631 = sbr.rel (%p629) target = $region120
        $region119: #{tpu_custom_call.1} parent=75 // pred_region
          %632 = dma.done [#allocation18], 256
        $region120: #{tpu_custom_call.1} parent=75 // pred_fallthru
          _
        // Predicated region
        $region121: #{tpu_custom_call.1} parent=75 // pred_check
          %p633 = pneg %p309
        $region122: #{tpu_custom_call.1} parent=75 // pred_check_branch
          %635 = sbr.rel (%p633) target = $region124
        $region123: #{tpu_custom_call.1} parent=75 // pred_region
          %636 = dma.done [#allocation21], 16
        $region124: #{tpu_custom_call.1} parent=75 // pred_fallthru
          _
        // Predicated region
        $region125: #{tpu_custom_call.1} parent=75 // pred_check
          %p637 = pneg %p330
        $region126: #{tpu_custom_call.1} parent=75 // pred_check_branch
          %639 = sbr.rel (%p637) target = $region128
        $region127: #{tpu_custom_call.1} parent=75 // pred_region
          %640 = dma.done [#allocation21], 256
        $region128: #{tpu_custom_call.1} parent=75 // pred_fallthru
          _
        // Predicated region
        $region129: #{tpu_custom_call.1} parent=75 // pred_check
          %p641 = pneg %p351
        $region130: #{tpu_custom_call.1} parent=75 // pred_check_branch
          %643 = sbr.rel (%p641) target = $region132
        $region131: #{tpu_custom_call.1} parent=75 // pred_region
          %644 = dma.done [#allocation24], 16
        $region132: #{tpu_custom_call.1} parent=75 // pred_fallthru
          _
        %s645 = sand.u32 %s60, 1
        %s646 = scalar_lea.sflag [#allocation3], %s645
        %s647 = sand.u32 %s60, 1
        %s648 = smul.addr %s647, 8
        %s649 = scalar_lea.vmem [#allocation2], %s648
        %p650 = pneg %p73
        %p651 = pneg %p70
        %s652 = sand.u32 %s40, 1
        %s653 = scalar_lea.sflag [#allocation6], %s652
        %s654 = sand.u32 %s86, 1
        %s655 = scalar_lea.vmem [#allocation5], %s654
        %p656 = pneg %p99
        %p657 = pneg %p96
        %p658 = pneg %p120
        %p659 = pneg %p117
        %p660 = pneg %p141
        %p661 = pneg %p138
        %p662 = pneg %p162
        %p663 = pneg %p159
        %p664 = pneg %p183
        %p665 = pneg %p180
        %p666 = pneg %p204
        %p667 = pneg %p201
        %p668 = pneg %p225
        %p669 = pneg %p222
        %p670 = pneg %p246
        %p671 = pneg %p243
        %p672 = pneg %p267
        %p673 = pneg %p264
        %p674 = pneg %p288
        %p675 = pneg %p285
        %p676 = pneg %p309
        %p677 = pneg %p306
        %p678 = pneg %p330
        %p679 = pneg %p327
        %p680 = pneg %p351
        %p681 = pneg %p348
        %p682 = pneg %p379
        %p683 = pneg %p376
        %s684 = sand.u32 %s366, 1
        %s685 = scalar_lea.sflag [#allocation4], %s684
        %s686 = sand.u32 %s366, 1
        %s687 = smul.addr %s686, 4
        %s688 = scalar_lea.vmem [#allocation25], %s687
        %v690 = vld [vmem:[%s584] sm:$0xff]
        %v691 = vld [vmem:[#allocation7] sm:$0x1]
        %v692 = vld [vmem:[#allocation8] sm:$0x1]
        %vm693 = vcmask 261120
        %v694 = vsel %vm693, %v690, 0.0
        %695 = vadd.xlane.f32.xlu0 %v694
        %v696 = vpop.xlane.xlu0 %695
        %v697 = vrcp.pop 32.0
        %v698 = vmul.f32 %v696, %v697
        %v699 = vsub.f32 %v690, %v698
        %v700 = vmul.f32 %v699, %v699
        %v701 = vsel %vm693, %v700, 0.0
        %702 = vadd.xlane.f32.xlu0 %v701
        %v703 = vpop.xlane.xlu0 %702
        %v704 = vmul.f32 %v703, 0.032258064
        %v705 = vrsqrt.pop %v704
        %v706 = vmul.f32 %v704, %v705
        %vm707 = vcmp.eq.f32.partialorder %v704, inf
        %v708 = vsel %vm707, %v704, %v706
        %vm709 = vcmp.eq.f32.partialorder %v704, 0.0
        %v710 = vand.u32 %v704, 2147483648
        %v711 = vsel %vm709, %v710, %v708
        %v712 = vadd.f32 %v711, 1e-06
        %v713 = vrcp.pop %v712
        %v715 = vlaneseq
        %v716 = vshrl.u32 %v715, 7
        %v717 = vsub.s32 0, %v716
        %v718 = vrot.slane %v691, %v717
        %v720 = vmul.f32 %v718, %v699
        %v721 = vmul.f32 %v720, %v713
        %v723 = vlaneseq
        %v724 = vshrl.u32 %v723, 7
        %v725 = vsub.s32 0, %v724
        %v726 = vrot.slane %v692, %v725
        %v728 = vadd.f32 %v721, %v726
        %v729 = vld [vmem:[#allocation10] sm:$0x1]
        %v730 = vld [vmem:[#allocation11] sm:$0x1]
        %v731 = vsel %vm693, %v728, 0.0
        %732 = vadd.xlane.f32.xlu0 %v731
        %v733 = vpop.xlane.xlu0 %732
        %v734 = vmul.f32 %v733, %v697
        %v735 = vsub.f32 %v728, %v734
        %v736 = vmul.f32 %v735, %v735
        %v737 = vsel %vm693, %v736, 0.0
        %738 = vadd.xlane.f32.xlu0 %v737
        %v739 = vpop.xlane.xlu0 %738
        %v740 = vmul.f32 %v739, 0.032258064
        %v741 = vrsqrt.pop %v740
        %v742 = vmul.f32 %v740, %v741
        %vm743 = vcmp.eq.f32.partialorder %v740, inf
        %v744 = vsel %vm743, %v740, %v742
        %vm745 = vcmp.eq.f32.partialorder %v740, 0.0
        %v746 = vand.u32 %v740, 2147483648
        %v747 = vsel %vm745, %v746, %v744
        %v748 = vadd.f32 %v747, 1e-06
        %v749 = vrcp.pop %v748
        %v751 = vlaneseq
        %v752 = vshrl.u32 %v751, 7
        %v753 = vsub.s32 0, %v752
        %v754 = vrot.slane %v729, %v753
        %v756 = vmul.f32 %v754, %v735
        %v757 = vmul.f32 %v756, %v749
        %v759 = vlaneseq
        %v760 = vshrl.u32 %v759, 7
        %v761 = vsub.s32 0, %v760
        %v762 = vrot.slane %v730, %v761
        %v764 = vadd.f32 %v757, %v762
        %v765 = vpack.c.bf16 %v764, %v764
        %v766 = vld [vmem:[#allocation13] sm:$0xf]
        %v767 = vld [vmem:[#allocation13 + $0x4] sm:$0xf]
        %v768 = vld [vmem:[#allocation13 + $0x8] sm:$0xf]
        %v769 = vld [vmem:[#allocation13 + $0xc] sm:$0xf]
        %v770 = vld [vmem:[#allocation14] sm:$0x1]
        %v772 = vlaneseq
        %v773 = vshrl.u32 %v772, 7
        %v774 = vsub.s32 0, %v773
        %v775 = vrot.slane %v770, %v774
        %v781 = vunpack.c.l.b16 %v766
        %v782 = vunpack.c.l.b16 %v767
        %v783 = vunpack.c.l.b16 %v768
        %v784 = vunpack.c.l.b16 %v769
        %v785 = vpack.c.b16 %v782, %v781
        %v786 = vpack.c.b16 %v784, %v783
        %v790 = vsel %vm693, %v765, 0
        %792 = vmatprep.subr.bf16.mxu0 0
        %793 = vmatpush1.bf16.msra.mxu0 %v785
        %794 = vmatprep.subr.bf16.mxu0 0
        %795 = vmatpush1.bf16.msra.mxu0 %v786
        %796 = vmatprep.subr.bf16.mxu0 0
        %797 = vmatpush1.bf16.msra.mxu0 0
        %798 = vmatprep.subr.bf16.mxu0 0
        %799 = vmatpush1.bf16.msra.mxu0 0
        %800 = vmatprep.subr.bf16.mxu0 0
        %801 = vmatpush1.bf16.msra.mxu0 0
        %802 = vmatprep.subr.bf16.mxu0 0
        %803 = vmatpush1.bf16.msra.mxu0 0
        %804 = vmatprep.subr.bf16.mxu0 0
        %805 = vmatpush1.bf16.msra.mxu0 0
        %806 = vmatprep.subr.bf16.mxu0 0
        %807 = vmatpush1.bf16.msra.mxu0 0
        %808 = vmatprep.subr.bf16.mxu0 0
        %809 = vmatpush1.bf16.msra.mxu0 0
        %810 = vmatprep.subr.bf16.mxu0 0
        %811 = vmatpush1.bf16.msra.mxu0 0
        %812 = vmatprep.subr.bf16.mxu0 0
        %813 = vmatpush1.bf16.msra.mxu0 0
        %814 = vmatprep.subr.bf16.mxu0 0
        %815 = vmatpush1.bf16.msra.mxu0 0
        %816 = vmatprep.subr.bf16.mxu0 0
        %817 = vmatpush1.bf16.msra.mxu0 0
        %818 = vmatprep.subr.bf16.mxu0 0
        %819 = vmatpush1.bf16.msra.mxu0 0
        %820 = vmatprep.subr.bf16.mxu0 0
        %821 = vmatpush1.bf16.msra.mxu0 0
        %822 = vmatprep.subr.bf16.mxu0 0
        %823 = vmatpush1.bf16.msra.mxu0 0
        %824 = vmatprep.mubr.bf16.mxu0 0
        %825 = vmatmul.mubr.bf16.gmra.mrb[0].mxu0 %v790
        %v826 = vpop.f32.mrb[0].mxu0
        %v827 = vadd.f32 %v775, %v826
        %v828 = vpop.f32.mrb[0].mxu0
        %v829 = vpop.f32.mrb[0].mxu0
        %v830 = vpop.f32.mrb[0].mxu0
        %831 = vdwg.mxu0
        %v832 = vld [vmem:[#allocation16] sm:$0xf]
        %v833 = vld [vmem:[#allocation16 + $0x4] sm:$0xf]
        %v834 = vld [vmem:[#allocation16 + $0x8] sm:$0xf]
        %v835 = vld [vmem:[#allocation16 + $0xc] sm:$0xf]
        %v836 = vld [vmem:[#allocation17] sm:$0x1]
        %v838 = vlaneseq
        %v839 = vshrl.u32 %v838, 7
        %v840 = vsub.s32 0, %v839
        %v841 = vrot.slane %v836, %v840
        %v847 = vunpack.c.l.b16 %v832
        %v848 = vunpack.c.l.b16 %v833
        %v849 = vunpack.c.l.b16 %v834
        %v850 = vunpack.c.l.b16 %v835
        %v851 = vpack.c.b16 %v848, %v847
        %v852 = vpack.c.b16 %v850, %v849
        %855 = vmatprep.subr.bf16.mxu0 0
        %856 = vmatpush1.bf16.msra.mxu0 %v851
        %857 = vmatprep.subr.bf16.mxu0 0
        %858 = vmatpush1.bf16.msra.mxu0 %v852
        %859 = vmatprep.subr.bf16.mxu0 0
        %860 = vmatpush1.bf16.msra.mxu0 0
        %861 = vmatprep.subr.bf16.mxu0 0
        %862 = vmatpush1.bf16.msra.mxu0 0
        %863 = vmatprep.subr.bf16.mxu0 0
        %864 = vmatpush1.bf16.msra.mxu0 0
        %865 = vmatprep.subr.bf16.mxu0 0
        %866 = vmatpush1.bf16.msra.mxu0 0
        %867 = vmatprep.subr.bf16.mxu0 0
        %868 = vmatpush1.bf16.msra.mxu0 0
        %869 = vmatprep.subr.bf16.mxu0 0
        %870 = vmatpush1.bf16.msra.mxu0 0
        %871 = vmatprep.subr.bf16.mxu0 0
        %872 = vmatpush1.bf16.msra.mxu0 0
        %873 = vmatprep.subr.bf16.mxu0 0
        %874 = vmatpush1.bf16.msra.mxu0 0
        %875 = vmatprep.subr.bf16.mxu0 0
        %876 = vmatpush1.bf16.msra.mxu0 0
        %877 = vmatprep.subr.bf16.mxu0 0
        %878 = vmatpush1.bf16.msra.mxu0 0
        %879 = vmatprep.subr.bf16.mxu0 0
        %880 = vmatpush1.bf16.msra.mxu0 0
        %881 = vmatprep.subr.bf16.mxu0 0
        %882 = vmatpush1.bf16.msra.mxu0 0
        %883 = vmatprep.subr.bf16.mxu0 0
        %884 = vmatpush1.bf16.msra.mxu0 0
        %885 = vmatprep.subr.bf16.mxu0 0
        %886 = vmatpush1.bf16.msra.mxu0 0
        %887 = vmatprep.mubr.bf16.mxu0 0
        %888 = vmatmul.mubr.bf16.gmra.mrb[0].mxu0 %v790
        %v889 = vpop.f32.mrb[0].mxu0
        %v890 = vadd.f32 %v841, %v889
        %v891 = vpop.f32.mrb[0].mxu0
        %v892 = vpop.f32.mrb[0].mxu0
        %v893 = vpop.f32.mrb[0].mxu0
        %894 = vdwg.mxu0
        %v895 = vld [vmem:[#allocation19] sm:$0xf]
        %v896 = vld [vmem:[#allocation19 + $0x4] sm:$0xf]
        %v897 = vld [vmem:[#allocation19 + $0x8] sm:$0xf]
        %v898 = vld [vmem:[#allocation19 + $0xc] sm:$0xf]
        %v899 = vld [vmem:[#allocation20] sm:$0x1]
        %v901 = vlaneseq
        %v902 = vshrl.u32 %v901, 7
        %v903 = vsub.s32 0, %v902
        %v904 = vrot.slane %v899, %v903
        %v910 = vunpack.c.l.b16 %v895
        %v911 = vunpack.c.l.b16 %v896
        %v912 = vunpack.c.l.b16 %v897
        %v913 = vunpack.c.l.b16 %v898
        %v914 = vpack.c.b16 %v911, %v910
        %v915 = vpack.c.b16 %v913, %v912
        %918 = vmatprep.subr.bf16.mxu0 0
        %919 = vmatpush1.bf16.msra.mxu0 %v914
        %920 = vmatprep.subr.bf16.mxu0 0
        %921 = vmatpush1.bf16.msra.mxu0 %v915
        %922 = vmatprep.subr.bf16.mxu0 0
        %923 = vmatpush1.bf16.msra.mxu0 0
        %924 = vmatprep.subr.bf16.mxu0 0
        %925 = vmatpush1.bf16.msra.mxu0 0
        %926 = vmatprep.subr.bf16.mxu0 0
        %927 = vmatpush1.bf16.msra.mxu0 0
        %928 = vmatprep.subr.bf16.mxu0 0
        %929 = vmatpush1.bf16.msra.mxu0 0
        %930 = vmatprep.subr.bf16.mxu0 0
        %931 = vmatpush1.bf16.msra.mxu0 0
        %932 = vmatprep.subr.bf16.mxu0 0
        %933 = vmatpush1.bf16.msra.mxu0 0
        %934 = vmatprep.subr.bf16.mxu0 0
        %935 = vmatpush1.bf16.msra.mxu0 0
        %936 = vmatprep.subr.bf16.mxu0 0
        %937 = vmatpush1.bf16.msra.mxu0 0
        %938 = vmatprep.subr.bf16.mxu0 0
        %939 = vmatpush1.bf16.msra.mxu0 0
        %940 = vmatprep.subr.bf16.mxu0 0
        %941 = vmatpush1.bf16.msra.mxu0 0
        %942 = vmatprep.subr.bf16.mxu0 0
        %943 = vmatpush1.bf16.msra.mxu0 0
        %944 = vmatprep.subr.bf16.mxu0 0
        %945 = vmatpush1.bf16.msra.mxu0 0
        %946 = vmatprep.subr.bf16.mxu0 0
        %947 = vmatpush1.bf16.msra.mxu0 0
        %948 = vmatprep.subr.bf16.mxu0 0
        %949 = vmatpush1.bf16.msra.mxu0 0
        %950 = vmatprep.mubr.bf16.mxu0 0
        %951 = vmatmul.mubr.bf16.gmra.mrb[0].mxu0 %v790
        %v952 = vpop.f32.mrb[0].mxu0
        %v953 = vadd.f32 %v904, %v952
        %v954 = vpop.f32.mrb[0].mxu0
        %v955 = vpop.f32.mrb[0].mxu0
        %v956 = vpop.f32.mrb[0].mxu0
        %957 = vdwg.mxu0
        %v958 = vmul.f32 %v827, 0.35355338
        %960 = vrot.lane.b32.xlu0 %v958, 120
        %v961 = vpop.permute.xlu0 %960
        %963 = vrot.lane.b32.xlu0 %v958, 112
        %v964 = vpop.permute.xlu0 %963
        %966 = vrot.lane.b32.xlu0 %v958, 104
        %v967 = vpop.permute.xlu0 %966
        %v969 = vpack.c.bf16 %v958, %v958
        %v970 = vpack.c.bf16 %v961, %v961
        %v971 = vpack.c.bf16 %v964, %v964
        %v972 = vpack.c.bf16 %v967, %v967
        %974 = vrot.lane.b32.xlu0 %v890, 120
        %v975 = vpop.permute.xlu0 %974
        %977 = vrot.lane.b32.xlu0 %v890, 112
        %v978 = vpop.permute.xlu0 %977
        %980 = vrot.lane.b32.xlu0 %v890, 104
        %v981 = vpop.permute.xlu0 %980
        %v983 = vpack.c.bf16 %v890, %v890
        %v984 = vpack.c.bf16 %v975, %v975
        %v985 = vpack.c.bf16 %v978, %v978
        %v986 = vpack.c.bf16 %v981, %v981
        %988 = vrot.lane.b32.xlu0 %v953, 120
        %v989 = vpop.permute.xlu0 %988
        %991 = vrot.lane.b32.xlu0 %v953, 112
        %v992 = vpop.permute.xlu0 %991
        %994 = vrot.lane.b32.xlu0 %v953, 104
        %v995 = vpop.permute.xlu0 %994
        %v997 = vpack.c.bf16 %v953, %v953
        %v998 = vpack.c.bf16 %v989, %v989
        %v999 = vpack.c.bf16 %v992, %v992
        %v1000 = vpack.c.bf16 %v995, %v995
        %v1001 = vld [vmem:[%s592] sm:$0x1]
        %v1003 = vlaneseq
        %v1004 = vshrl.u32 %v1003, 7
        %v1005 = vsub.s32 0, %v1004
        %v1006 = vrot.slane %v1001, %v1005
        %vm1008 = vcmask 64512
        %v1010 = vsel %vm1008, %v969, 0
        %v1013 = vsel %vm1008, %v983, 0
        %1015 = vmatprep.subr.bf16.mxu0 0
        %1016 = vmatpush1.bf16.xpose.msra.mxu0 %v1013
        %1017 = vmatprep.subr.bf16.mxu0 0
        %1018 = vmatpush1.bf16.xpose.msra.mxu0 0
        %1019 = vmatprep.subr.bf16.mxu0 0
        %1020 = vmatpush1.bf16.xpose.msra.mxu0 0
        %1021 = vmatprep.subr.bf16.mxu0 0
        %1022 = vmatpush1.bf16.xpose.msra.mxu0 0
        %1023 = vmatprep.subr.bf16.mxu0 0
        %1024 = vmatpush1.bf16.xpose.msra.mxu0 0
        %1025 = vmatprep.subr.bf16.mxu0 0
        %1026 = vmatpush1.bf16.xpose.msra.mxu0 0
        %1027 = vmatprep.subr.bf16.mxu0 0
        %1028 = vmatpush1.bf16.xpose.msra.mxu0 0
        %1029 = vmatprep.subr.bf16.mxu0 0
        %1030 = vmatpush1.bf16.xpose.msra.mxu0 0
        %1031 = vmatprep.subr.bf16.mxu0 0
        %1032 = vmatpush1.bf16.xpose.msra.mxu0 0
        %1033 = vmatprep.subr.bf16.mxu0 0
        %1034 = vmatpush1.bf16.xpose.msra.mxu0 0
        %1035 = vmatprep.subr.bf16.mxu0 0
        %1036 = vmatpush1.bf16.xpose.msra.mxu0 0
        %1037 = vmatprep.subr.bf16.mxu0 0
        %1038 = vmatpush1.bf16.xpose.msra.mxu0 0
        %1039 = vmatprep.subr.bf16.mxu0 0
        %1040 = vmatpush1.bf16.xpose.msra.mxu0 0
        %1041 = vmatprep.subr.bf16.mxu0 0
        %1042 = vmatpush1.bf16.xpose.msra.mxu0 0
        %1043 = vmatprep.subr.bf16.mxu0 0
        %1044 = vmatpush1.bf16.xpose.msra.mxu0 0
        %1045 = vmatprep.subr.bf16.mxu0 0
        %1046 = vmatpush1.bf16.xpose.msra.mxu0 0
        %1047 = vmatprep.mubr.bf16.mxu0 0
        %1048 = vmatmul.mubr.bf16.gmra.mrb[0].mxu0 %v1010
        %v1049 = vpop.f32.mrb[0].mxu0
        %v1050 = vadd.f32 %v1006, %v1049
        %v1051 = vpop.f32.mrb[0].mxu0
        %v1052 = vpop.f32.mrb[0].mxu0
        %v1053 = vpop.f32.mrb[0].mxu0
        %1054 = vdwg.mxu0
        %v1056 = vsel %vm1008, %v970, 0
        %v1059 = vsel %vm1008, %v984, 0
        %1061 = vmatprep.subr.bf16.mxu0 0
        %1062 = vmatpush1.bf16.xpose.msra.mxu0 %v1059
        %1063 = vmatprep.subr.bf16.mxu0 0
        %1064 = vmatpush1.bf16.xpose.msra.mxu0 0
        %1065 = vmatprep.subr.bf16.mxu0 0
        %1066 = vmatpush1.bf16.xpose.msra.mxu0 0
        %1067 = vmatprep.subr.bf16.mxu0 0
        %1068 = vmatpush1.bf16.xpose.msra.mxu0 0
        %1069 = vmatprep.subr.bf16.mxu0 0
        %1070 = vmatpush1.bf16.xpose.msra.mxu0 0
        %1071 = vmatprep.subr.bf16.mxu0 0
        %1072 = vmatpush1.bf16.xpose.msra.mxu0 0
        %1073 = vmatprep.subr.bf16.mxu0 0
        %1074 = vmatpush1.bf16.xpose.msra.mxu0 0
        %1075 = vmatprep.subr.bf16.mxu0 0
        %1076 = vmatpush1.bf16.xpose.msra.mxu0 0
        %1077 = vmatprep.subr.bf16.mxu0 0
        %1078 = vmatpush1.bf16.xpose.msra.mxu0 0
        %1079 = vmatprep.subr.bf16.mxu0 0
        %1080 = vmatpush1.bf16.xpose.msra.mxu0 0
        %1081 = vmatprep.subr.bf16.mxu0 0
        %1082 = vmatpush1.bf16.xpose.msra.mxu0 0
        %1083 = vmatprep.subr.bf16.mxu0 0
        %1084 = vmatpush1.bf16.xpose.msra.mxu0 0
        %1085 = vmatprep.subr.bf16.mxu0 0
        %1086 = vmatpush1.bf16.xpose.msra.mxu0 0
        %1087 = vmatprep.subr.bf16.mxu0 0
        %1088 = vmatpush1.bf16.xpose.msra.mxu0 0
        %1089 = vmatprep.subr.bf16.mxu0 0
        %1090 = vmatpush1.bf16.xpose.msra.mxu0 0
        %1091 = vmatprep.subr.bf16.mxu0 0
        %1092 = vmatpush1.bf16.xpose.msra.mxu0 0
        %1093 = vmatprep.mubr.bf16.mxu0 0
        %1094 = vmatmul.mubr.bf16.gmra.mrb[0].mxu0 %v1056
        %v1095 = vpop.f32.mrb[0].mxu0
        %v1096 = vadd.f32 %v1006, %v1095
        %v1097 = vpop.f32.mrb[0].mxu0
        %v1098 = vpop.f32.mrb[0].mxu0
        %v1099 = vpop.f32.mrb[0].mxu0
        %1100 = vdwg.mxu0
        %v1102 = vsel %vm1008, %v971, 0
        %v1105 = vsel %vm1008, %v985, 0
        %1107 = vmatprep.subr.bf16.mxu0 0
        %1108 = vmatpush1.bf16.xpose.msra.mxu0 %v1105
        %1109 = vmatprep.subr.bf16.mxu0 0
        %1110 = vmatpush1.bf16.xpose.msra.mxu0 0
        %1111 = vmatprep.subr.bf16.mxu0 0
        %1112 = vmatpush1.bf16.xpose.msra.mxu0 0
        %1113 = vmatprep.subr.bf16.mxu0 0
        %1114 = vmatpush1.bf16.xpose.msra.mxu0 0
        %1115 = vmatprep.subr.bf16.mxu0 0
        %1116 = vmatpush1.bf16.xpose.msra.mxu0 0
        %1117 = vmatprep.subr.bf16.mxu0 0
        %1118 = vmatpush1.bf16.xpose.msra.mxu0 0
        %1119 = vmatprep.subr.bf16.mxu0 0
        %1120 = vmatpush1.bf16.xpose.msra.mxu0 0
        %1121 = vmatprep.subr.bf16.mxu0 0
        %1122 = vmatpush1.bf16.xpose.msra.mxu0 0
        %1123 = vmatprep.subr.bf16.mxu0 0
        %1124 = vmatpush1.bf16.xpose.msra.mxu0 0
        %1125 = vmatprep.subr.bf16.mxu0 0
        %1126 = vmatpush1.bf16.xpose.msra.mxu0 0
        %1127 = vmatprep.subr.bf16.mxu0 0
        %1128 = vmatpush1.bf16.xpose.msra.mxu0 0
        %1129 = vmatprep.subr.bf16.mxu0 0
        %1130 = vmatpush1.bf16.xpose.msra.mxu0 0
        %1131 = vmatprep.subr.bf16.mxu0 0
        %1132 = vmatpush1.bf16.xpose.msra.mxu0 0
        %1133 = vmatprep.subr.bf16.mxu0 0
        %1134 = vmatpush1.bf16.xpose.msra.mxu0 0
        %1135 = vmatprep.subr.bf16.mxu0 0
        %1136 = vmatpush1.bf16.xpose.msra.mxu0 0
        %1137 = vmatprep.subr.bf16.mxu0 0
        %1138 = vmatpush1.bf16.xpose.msra.mxu0 0
        %1139 = vmatprep.mubr.bf16.mxu0 0
        %1140 = vmatmul.mubr.bf16.gmra.mrb[0].mxu0 %v1102
        %v1141 = vpop.f32.mrb[0].mxu0
        %v1142 = vadd.f32 %v1006, %v1141
        %v1143 = vpop.f32.mrb[0].mxu0
        %v1144 = vpop.f32.mrb[0].mxu0
        %v1145 = vpop.f32.mrb[0].mxu0
        %1146 = vdwg.mxu0
        %v1148 = vsel %vm1008, %v972, 0
        %v1151 = vsel %vm1008, %v986, 0
        %1153 = vmatprep.subr.bf16.mxu0 0
        %1154 = vmatpush1.bf16.xpose.msra.mxu0 %v1151
        %1155 = vmatprep.subr.bf16.mxu0 0
        %1156 = vmatpush1.bf16.xpose.msra.mxu0 0
        %1157 = vmatprep.subr.bf16.mxu0 0
        %1158 = vmatpush1.bf16.xpose.msra.mxu0 0
        %1159 = vmatprep.subr.bf16.mxu0 0
        %1160 = vmatpush1.bf16.xpose.msra.mxu0 0
        %1161 = vmatprep.subr.bf16.mxu0 0
        %1162 = vmatpush1.bf16.xpose.msra.mxu0 0
        %1163 = vmatprep.subr.bf16.mxu0 0
        %1164 = vmatpush1.bf16.xpose.msra.mxu0 0
        %1165 = vmatprep.subr.bf16.mxu0 0
        %1166 = vmatpush1.bf16.xpose.msra.mxu0 0
        %1167 = vmatprep.subr.bf16.mxu0 0
        %1168 = vmatpush1.bf16.xpose.msra.mxu0 0
        %1169 = vmatprep.subr.bf16.mxu0 0
        %1170 = vmatpush1.bf16.xpose.msra.mxu0 0
        %1171 = vmatprep.subr.bf16.mxu0 0
        %1172 = vmatpush1.bf16.xpose.msra.mxu0 0
        %1173 = vmatprep.subr.bf16.mxu0 0
        %1174 = vmatpush1.bf16.xpose.msra.mxu0 0
        %1175 = vmatprep.subr.bf16.mxu0 0
        %1176 = vmatpush1.bf16.xpose.msra.mxu0 0
        %1177 = vmatprep.subr.bf16.mxu0 0
        %1178 = vmatpush1.bf16.xpose.msra.mxu0 0
        %1179 = vmatprep.subr.bf16.mxu0 0
        %1180 = vmatpush1.bf16.xpose.msra.mxu0 0
        %1181 = vmatprep.subr.bf16.mxu0 0
        %1182 = vmatpush1.bf16.xpose.msra.mxu0 0
        %1183 = vmatprep.subr.bf16.mxu0 0
        %1184 = vmatpush1.bf16.xpose.msra.mxu0 0
        %1185 = vmatprep.mubr.bf16.mxu0 0
        %1186 = vmatmul.mubr.bf16.gmra.mrb[0].mxu0 %v1148
        %v1187 = vpop.f32.mrb[0].mxu0
        %v1188 = vadd.f32 %v1006, %v1187
        %v1189 = vpop.f32.mrb[0].mxu0
        %v1190 = vpop.f32.mrb[0].mxu0
        %v1191 = vpop.f32.mrb[0].mxu0
        %1192 = vdwg.mxu0
        %v1193 = vsel %vm1008, %v1050, -inf
        %1194 = vmax.xlane.f32.xlu0 %v1193
        %v1195 = vpop.xlane.xlu0 %1194
        %v1196 = vsel %vm1008, %v1096, -inf
        %1197 = vmax.xlane.f32.xlu0 %v1196
        %v1198 = vpop.xlane.xlu0 %1197
        %v1199 = vsel %vm1008, %v1142, -inf
        %1200 = vmax.xlane.f32.xlu0 %v1199
        %v1201 = vpop.xlane.xlu0 %1200
        %v1202 = vsel %vm1008, %v1188, -inf
        %1203 = vmax.xlane.f32.xlu0 %v1202
        %v1204 = vpop.xlane.xlu0 %1203
        %v1205 = vsub.f32 %v1050, %v1195
        %v1206 = vsub.f32 %v1096, %v1198
        %v1207 = vsub.f32 %v1142, %v1201
        %v1208 = vsub.f32 %v1188, %v1204
        %v1209 = vmul.f32 %v1205, 1.442695
        %v1210 = vpow.pop %v1209
        %v1211 = vmul.f32 %v1206, 1.442695
        %v1212 = vpow.pop %v1211
        %v1213 = vmul.f32 %v1207, 1.442695
        %v1214 = vpow.pop %v1213
        %v1215 = vmul.f32 %v1208, 1.442695
        %v1216 = vpow.pop %v1215
        %v1217 = vsel %vm1008, %v1210, 0.0
        %1218 = vadd.xlane.f32.xlu0 %v1217
        %v1219 = vpop.xlane.xlu0 %1218
        %v1220 = vsel %vm1008, %v1212, 0.0
        %1221 = vadd.xlane.f32.xlu0 %v1220
        %v1222 = vpop.xlane.xlu0 %1221
        %v1223 = vsel %vm1008, %v1214, 0.0
        %1224 = vadd.xlane.f32.xlu0 %v1223
        %v1225 = vpop.xlane.xlu0 %1224
        %v1226 = vsel %vm1008, %v1216, 0.0
        %1227 = vadd.xlane.f32.xlu0 %v1226
        %v1228 = vpop.xlane.xlu0 %1227
        %v1229 = vpack.c.bf16 %v1210, %v1210
        %v1230 = vpack.c.bf16 %v1212, %v1212
        %v1231 = vpack.c.bf16 %v1214, %v1214
        %v1232 = vpack.c.bf16 %v1216, %v1216
        %v1234 = vsel %vm1008, %v1229, 0
        %vm1236 = vcmask 1043456
        %v1238 = vsel %vm1236, %v997, 0
        %1240 = vmatprep.subr.bf16.mxu0 0
        %1241 = vmatpush1.bf16.msra.mxu0 %v1238
        %1242 = vmatprep.subr.bf16.mxu0 0
        %1243 = vmatpush1.bf16.msra.mxu0 0
        %1244 = vmatprep.subr.bf16.mxu0 0
        %1245 = vmatpush1.bf16.msra.mxu0 0
        %1246 = vmatprep.subr.bf16.mxu0 0
        %1247 = vmatpush1.bf16.msra.mxu0 0
        %1248 = vmatprep.subr.bf16.mxu0 0
        %1249 = vmatpush1.bf16.msra.mxu0 0
        %1250 = vmatprep.subr.bf16.mxu0 0
        %1251 = vmatpush1.bf16.msra.mxu0 0
        %1252 = vmatprep.subr.bf16.mxu0 0
        %1253 = vmatpush1.bf16.msra.mxu0 0
        %1254 = vmatprep.subr.bf16.mxu0 0
        %1255 = vmatpush1.bf16.msra.mxu0 0
        %1256 = vmatprep.subr.bf16.mxu0 0
        %1257 = vmatpush1.bf16.msra.mxu0 0
        %1258 = vmatprep.subr.bf16.mxu0 0
        %1259 = vmatpush1.bf16.msra.mxu0 0
        %1260 = vmatprep.subr.bf16.mxu0 0
        %1261 = vmatpush1.bf16.msra.mxu0 0
        %1262 = vmatprep.subr.bf16.mxu0 0
        %1263 = vmatpush1.bf16.msra.mxu0 0
        %1264 = vmatprep.subr.bf16.mxu0 0
        %1265 = vmatpush1.bf16.msra.mxu0 0
        %1266 = vmatprep.subr.bf16.mxu0 0
        %1267 = vmatpush1.bf16.msra.mxu0 0
        %1268 = vmatprep.subr.bf16.mxu0 0
        %1269 = vmatpush1.bf16.msra.mxu0 0
        %1270 = vmatprep.subr.bf16.mxu0 0
        %1271 = vmatpush1.bf16.msra.mxu0 0
        %1272 = vmatprep.mubr.bf16.mxu0 0
        %1273 = vmatmul.mubr.bf16.gmra.mrb[0].mxu0 %v1234
        %v1274 = vpop.f32.mrb[0].mxu0
        %v1275 = vadd.f32 0.0, %v1274
        %v1276 = vpop.f32.mrb[0].mxu0
        %v1277 = vpop.f32.mrb[0].mxu0
        %v1278 = vpop.f32.mrb[0].mxu0
        %1279 = vdwg.mxu0
        %v1281 = vsel %vm1008, %v1230, 0
        %v1284 = vsel %vm1236, %v998, 0
        %1286 = vmatprep.subr.bf16.mxu0 0
        %1287 = vmatpush1.bf16.msra.mxu0 %v1284
        %1288 = vmatprep.subr.bf16.mxu0 0
        %1289 = vmatpush1.bf16.msra.mxu0 0
        %1290 = vmatprep.subr.bf16.mxu0 0
        %1291 = vmatpush1.bf16.msra.mxu0 0
        %1292 = vmatprep.subr.bf16.mxu0 0
        %1293 = vmatpush1.bf16.msra.mxu0 0
        %1294 = vmatprep.subr.bf16.mxu0 0
        %1295 = vmatpush1.bf16.msra.mxu0 0
        %1296 = vmatprep.subr.bf16.mxu0 0
        %1297 = vmatpush1.bf16.msra.mxu0 0
        %1298 = vmatprep.subr.bf16.mxu0 0
        %1299 = vmatpush1.bf16.msra.mxu0 0
        %1300 = vmatprep.subr.bf16.mxu0 0
        %1301 = vmatpush1.bf16.msra.mxu0 0
        %1302 = vmatprep.subr.bf16.mxu0 0
        %1303 = vmatpush1.bf16.msra.mxu0 0
        %1304 = vmatprep.subr.bf16.mxu0 0
        %1305 = vmatpush1.bf16.msra.mxu0 0
        %1306 = vmatprep.subr.bf16.mxu0 0
        %1307 = vmatpush1.bf16.msra.mxu0 0
        %1308 = vmatprep.subr.bf16.mxu0 0
        %1309 = vmatpush1.bf16.msra.mxu0 0
        %1310 = vmatprep.subr.bf16.mxu0 0
        %1311 = vmatpush1.bf16.msra.mxu0 0
        %1312 = vmatprep.subr.bf16.mxu0 0
        %1313 = vmatpush1.bf16.msra.mxu0 0
        %1314 = vmatprep.subr.bf16.mxu0 0
        %1315 = vmatpush1.bf16.msra.mxu0 0
        %1316 = vmatprep.subr.bf16.mxu0 0
        %1317 = vmatpush1.bf16.msra.mxu0 0
        %1318 = vmatprep.mubr.bf16.mxu0 0
        %1319 = vmatmul.mubr.bf16.gmra.mrb[0].mxu0 %v1281
        %v1320 = vpop.f32.mrb[0].mxu0
        %v1321 = vadd.f32 0.0, %v1320
        %v1322 = vpop.f32.mrb[0].mxu0
        %v1323 = vpop.f32.mrb[0].mxu0
        %v1324 = vpop.f32.mrb[0].mxu0
        %1325 = vdwg.mxu0
        %v1327 = vsel %vm1008, %v1231, 0
        %v1330 = vsel %vm1236, %v999, 0
        %1332 = vmatprep.subr.bf16.mxu0 0
        %1333 = vmatpush1.bf16.msra.mxu0 %v1330
        %1334 = vmatprep.subr.bf16.mxu0 0
        %1335 = vmatpush1.bf16.msra.mxu0 0
        %1336 = vmatprep.subr.bf16.mxu0 0
        %1337 = vmatpush1.bf16.msra.mxu0 0
        %1338 = vmatprep.subr.bf16.mxu0 0
        %1339 = vmatpush1.bf16.msra.mxu0 0
        %1340 = vmatprep.subr.bf16.mxu0 0
        %1341 = vmatpush1.bf16.msra.mxu0 0
        %1342 = vmatprep.subr.bf16.mxu0 0
        %1343 = vmatpush1.bf16.msra.mxu0 0
        %1344 = vmatprep.subr.bf16.mxu0 0
        %1345 = vmatpush1.bf16.msra.mxu0 0
        %1346 = vmatprep.subr.bf16.mxu0 0
        %1347 = vmatpush1.bf16.msra.mxu0 0
        %1348 = vmatprep.subr.bf16.mxu0 0
        %1349 = vmatpush1.bf16.msra.mxu0 0
        %1350 = vmatprep.subr.bf16.mxu0 0
        %1351 = vmatpush1.bf16.msra.mxu0 0
        %1352 = vmatprep.subr.bf16.mxu0 0
        %1353 = vmatpush1.bf16.msra.mxu0 0
        %1354 = vmatprep.subr.bf16.mxu0 0
        %1355 = vmatpush1.bf16.msra.mxu0 0
        %1356 = vmatprep.subr.bf16.mxu0 0
        %1357 = vmatpush1.bf16.msra.mxu0 0
        %1358 = vmatprep.subr.bf16.mxu0 0
        %1359 = vmatpush1.bf16.msra.mxu0 0
        %1360 = vmatprep.subr.bf16.mxu0 0
        %1361 = vmatpush1.bf16.msra.mxu0 0
        %1362 = vmatprep.subr.bf16.mxu0 0
        %1363 = vmatpush1.bf16.msra.mxu0 0
        %1364 = vmatprep.mubr.bf16.mxu0 0
        %1365 = vmatmul.mubr.bf16.gmra.mrb[0].mxu0 %v1327
        %v1366 = vpop.f32.mrb[0].mxu0
        %v1367 = vadd.f32 0.0, %v1366
        %v1368 = vpop.f32.mrb[0].mxu0
        %v1369 = vpop.f32.mrb[0].mxu0
        %v1370 = vpop.f32.mrb[0].mxu0
        %1371 = vdwg.mxu0
        %v1373 = vsel %vm1008, %v1232, 0
        %v1376 = vsel %vm1236, %v1000, 0
        %1378 = vmatprep.subr.bf16.mxu0 0
        %1379 = vmatpush1.bf16.msra.mxu0 %v1376
        %1380 = vmatprep.subr.bf16.mxu0 0
        %1381 = vmatpush1.bf16.msra.mxu0 0
        %1382 = vmatprep.subr.bf16.mxu0 0
        %1383 = vmatpush1.bf16.msra.mxu0 0
        %1384 = vmatprep.subr.bf16.mxu0 0
        %1385 = vmatpush1.bf16.msra.mxu0 0
        %1386 = vmatprep.subr.bf16.mxu0 0
        %1387 = vmatpush1.bf16.msra.mxu0 0
        %1388 = vmatprep.subr.bf16.mxu0 0
        %1389 = vmatpush1.bf16.msra.mxu0 0
        %1390 = vmatprep.subr.bf16.mxu0 0
        %1391 = vmatpush1.bf16.msra.mxu0 0
        %1392 = vmatprep.subr.bf16.mxu0 0
        %1393 = vmatpush1.bf16.msra.mxu0 0
        %1394 = vmatprep.subr.bf16.mxu0 0
        %1395 = vmatpush1.bf16.msra.mxu0 0
        %1396 = vmatprep.subr.bf16.mxu0 0
        %1397 = vmatpush1.bf16.msra.mxu0 0
        %1398 = vmatprep.subr.bf16.mxu0 0
        %1399 = vmatpush1.bf16.msra.mxu0 0
        %1400 = vmatprep.subr.bf16.mxu0 0
        %1401 = vmatpush1.bf16.msra.mxu0 0
        %1402 = vmatprep.subr.bf16.mxu0 0
        %1403 = vmatpush1.bf16.msra.mxu0 0
        %1404 = vmatprep.subr.bf16.mxu0 0
        %1405 = vmatpush1.bf16.msra.mxu0 0
        %1406 = vmatprep.subr.bf16.mxu0 0
        %1407 = vmatpush1.bf16.msra.mxu0 0
        %1408 = vmatprep.subr.bf16.mxu0 0
        %1409 = vmatpush1.bf16.msra.mxu0 0
        %1410 = vmatprep.mubr.bf16.mxu0 0
        %1411 = vmatmul.mubr.bf16.gmra.mrb[0].mxu0 %v1373
        %v1412 = vpop.f32.mrb[0].mxu0
        %v1413 = vadd.f32 0.0, %v1412
        %v1414 = vpop.f32.mrb[0].mxu0
        %v1415 = vpop.f32.mrb[0].mxu0
        %v1416 = vpop.f32.mrb[0].mxu0
        %1417 = vdwg.mxu0
        %v1418 = vrcp.pop %v1219
        %v1419 = vrcp.pop %v1222
        %v1420 = vrcp.pop %v1225
        %v1421 = vrcp.pop %v1228
        %v1422 = vmul.f32 %v1275, %v1418
        %v1423 = vmul.f32 %v1321, %v1419
        %v1424 = vmul.f32 %v1367, %v1420
        %v1425 = vmul.f32 %v1413, %v1421
        %1427 = vrot.lane.b32.xlu0 %v1423, 8
        %v1428 = vpop.permute.xlu0 %1427
        %1431 = vrot.lane.b32.xlu0 %v1424, 16
        %v1432 = vpop.permute.xlu0 %1431
        %1435 = vrot.lane.b32.xlu0 %v1425, 24
        %v1436 = vpop.permute.xlu0 %1435
        %v1438 = vsel %vm1008, %v1422, %v1428
        %vm1439 = vcmask 130048
        %v1440 = vsel %vm1439, %v1438, %v1432
        %vm1441 = vcmask 195584
        %v1442 = vsel %vm1441, %v1440, %v1436
        %v1443 = vpack.c.bf16 %v1442, %v1442
        %v1444 = vld [vmem:[#allocation22] sm:$0xf]
        %v1445 = vld [vmem:[#allocation22 + $0x4] sm:$0xf]
        %v1446 = vld [vmem:[#allocation22 + $0x8] sm:$0xf]
        %v1447 = vld [vmem:[#allocation22 + $0xc] sm:$0xf]
        %v1448 = vld [vmem:[#allocation23] sm:$0x1]
        %v1450 = vlaneseq
        %v1451 = vshrl.u32 %v1450, 7
        %v1452 = vsub.s32 0, %v1451
        %v1453 = vrot.slane %v1448, %v1452
        %v1459 = vunpack.c.l.b16 %v1444
        %v1460 = vunpack.c.l.b16 %v1445
        %v1461 = vunpack.c.l.b16 %v1446
        %v1462 = vunpack.c.l.b16 %v1447
        %v1463 = vpack.c.b16 %v1460, %v1459
        %v1464 = vpack.c.b16 %v1462, %v1461
        %v1468 = vsel %vm693, %v1443, 0
        %1470 = vmatprep.subr.bf16.mxu0 0
        %1471 = vmatpush1.bf16.msra.mxu0 %v1463
        %1472 = vmatprep.subr.bf16.mxu0 0
        %1473 = vmatpush1.bf16.msra.mxu0 %v1464
        %1474 = vmatprep.subr.bf16.mxu0 0
        %1475 = vmatpush1.bf16.msra.mxu0 0
        %1476 = vmatprep.subr.bf16.mxu0 0
        %1477 = vmatpush1.bf16.msra.mxu0 0
        %1478 = vmatprep.subr.bf16.mxu0 0
        %1479 = vmatpush1.bf16.msra.mxu0 0
        %1480 = vmatprep.subr.bf16.mxu0 0
        %1481 = vmatpush1.bf16.msra.mxu0 0
        %1482 = vmatprep.subr.bf16.mxu0 0
        %1483 = vmatpush1.bf16.msra.mxu0 0
        %1484 = vmatprep.subr.bf16.mxu0 0
        %1485 = vmatpush1.bf16.msra.mxu0 0
        %1486 = vmatprep.subr.bf16.mxu0 0
        %1487 = vmatpush1.bf16.msra.mxu0 0
        %1488 = vmatprep.subr.bf16.mxu0 0
        %1489 = vmatpush1.bf16.msra.mxu0 0
        %1490 = vmatprep.subr.bf16.mxu0 0
        %1491 = vmatpush1.bf16.msra.mxu0 0
        %1492 = vmatprep.subr.bf16.mxu0 0
        %1493 = vmatpush1.bf16.msra.mxu0 0
        %1494 = vmatprep.subr.bf16.mxu0 0
        %1495 = vmatpush1.bf16.msra.mxu0 0
        %1496 = vmatprep.subr.bf16.mxu0 0
        %1497 = vmatpush1.bf16.msra.mxu0 0
        %1498 = vmatprep.subr.bf16.mxu0 0
        %1499 = vmatpush1.bf16.msra.mxu0 0
        %1500 = vmatprep.subr.bf16.mxu0 0
        %1501 = vmatpush1.bf16.msra.mxu0 0
        %1502 = vmatprep.mubr.bf16.mxu0 0
        %1503 = vmatmul.mubr.bf16.gmra.mrb[0].mxu0 %v1468
        %v1504 = vpop.f32.mrb[0].mxu0
        %v1505 = vadd.f32 %v1453, %v1504
        %v1506 = vpop.f32.mrb[0].mxu0
        %v1507 = vpop.f32.mrb[0].mxu0
        %v1508 = vpop.f32.mrb[0].mxu0
        %1509 = vdwg.mxu0
        %v1510 = vadd.f32 %v728, %v1505
        %v1511 = vpack.c.bf16 %v1510, %v1510
        %vm1512 = vcmask 257024
        %1513 = vst.msk [vmem:[%s688] sm:$0xf] %vm1512, %v1511
        %s1514 = sand.u32 %s366, 1
        %s1515 = scalar_lea.sflag [#allocation4], %s1514
        %s1516 = sand.u32 %s366, 1
        %s1517 = smul.addr %s1516, 4
        %s1518 = scalar_lea.vmem [#allocation25], %s1517
        // Predicated region
        $region133: #{tpu_custom_call.1} parent=75 // pred_check
          %p1519 = pneg %p376
        $region134: #{tpu_custom_call.1} parent=75 // pred_check_branch
          %1521 = sbr.rel (%p1519) target = $region136
        $region135: #{tpu_custom_call.1} parent=75 // pred_region
          %s1523 = ssub.s32 64, 64
          %1524 = vsyncadd %s1515, %s1523
          %s1525 = sadd.s32 %s45, %s44
          %s1526 = smul.addr %s1525, 64
          %s1527 = scalar_lea.hbm %s14, %s1526
          %s1529 = sshll.u32 %s1518, 4
          %s1530 = int_to_ptr.vmem [resolvable:$true] %s1529
          %1532 = dma.vmem_to_hbm [thread:$0]  %s1530, 64, %s1527, %s1515
        $region136: #{tpu_custom_call.1} parent=75 // pred_fallthru
          _
      $region76: #{tpu_custom_call.1} parent=5 // pred_fallthru
        _
      %p1533 = scmp.le.s32.totalorder 2, %s35
      // Predicated region
      $region137: #{tpu_custom_call.1} parent=5 // pred_check
        %p1534 = pneg %p1533
      $region138: #{tpu_custom_call.1} parent=5 // pred_check_branch
        %1536 = sbr.rel (%p1534) target = $region140
      $region139: #{tpu_custom_call.1} parent=5 // pred_region
        %s1537 = ssub.s32 %s35, 2
        // Predicated region
        $region141: #{tpu_custom_call.1} parent=139 // pred_check
          %p1538 = pneg %p382
        $region142: #{tpu_custom_call.1} parent=139 // pred_check_branch
          %1540 = sbr.rel (%p1538) target = $region144
        $region143: #{tpu_custom_call.1} parent=139 // pred_region
          %s1541 = sand.u32 %s367, 1
          %s1542 = scalar_lea.sflag [#allocation4], %s1541
          %s1543 = sand.u32 %s367, 1
          %s1544 = smul.addr %s1543, 4
          %s1545 = scalar_lea.vmem [#allocation25], %s1544
          %1546 = dma.done %s1542, 64
        $region144: #{tpu_custom_call.1} parent=139 // pred_fallthru
          _
      $region140: #{tpu_custom_call.1} parent=5 // pred_fallthru
        _
    $region6: #{tpu_custom_call.1} parent=1 // loop_footer
      %s39 = sadd.s32 1, %s35
    $region7: #{tpu_custom_call.1} parent=1 // loop_footer_branch
      %34 = sbr.rel target = $region3
    $region8: #{tpu_custom_call.1} parent=1 // loop_exit
      _
    %1547 = vsyncpa [#allocation3], 1
    %s1548 = scalar_lea.sflag [#allocation3], 1
    %1549 = vsyncpa %s1548, 1
    %1550 = vsyncpa [#allocation6], 1
    %s1551 = scalar_lea.sflag [#allocation6], 1
    %1552 = vsyncpa %s1551, 1
    %1553 = vsyncpa [#allocation9], 1
    %1554 = vsyncpa [#allocation12], 1
    %1555 = vsyncpa [#allocation15], 1
    %1556 = vsyncpa [#allocation18], 1
    %1557 = vsyncpa [#allocation21], 1
    %1558 = vsyncpa [#allocation24], 1
    %1559 = vsyncpa [#allocation4], 1
    %s1560 = scalar_lea.sflag [#allocation4], 1
    %1561 = vsyncpa %s1560, 1

</llo_original>
